<compile_context>
chip_gen: v5e
topology: v5e:2x2
jax: 0.10.0
libtpu: 0.0.40
codegen_flags: <defaults>
</compile_context>

<pallas_src>
import jax
import jax.numpy as jnp
from jax import lax
from jax.experimental import pallas as pl
from jax.experimental.pallas import tpu as pltpu


def _round_up(x, m):
    return (x + m - 1) // m * m


# ---------------------------------------------------------------------------
# Pallas kernel: weight-stationary matmul, lane-dense along the pixel axis.
#   out (M, J) = A (M, K) @ B (K, J),  M small (channels), J huge (pixels).
# Grid = (J tiles ["parallel"], K tiles ["arbitrary", innermost]).
# ---------------------------------------------------------------------------

def _wsmall_matmul_kernel(a_ref, b_ref, o_ref, acc_ref):
    @pl.when(pl.program_id(1) == 0)
    def _init():
        acc_ref[...] = jnp.zeros_like(acc_ref)

    acc_ref[...] += jnp.dot(a_ref[...], b_ref[...],
                            preferred_element_type=jnp.float32)

    @pl.when(pl.program_id(1) == pl.num_programs(1) - 1)
    def _store():
        o_ref[...] = acc_ref[...].astype(o_ref.dtype)


def _vmem_budget_and_tile_cap():
    """Generation-gated VMEM limit + max pixel-tile width.

    v5e/v6e (128 MiB physical VMEM) -> 64 MiB scoped limit, tiles up to 4096.
    v7x (64 MiB per TensorCore)     -> 32 MiB scoped limit, tiles up to 2048.
    """
    cap = None
    try:
        info = pltpu.get_tpu_info()
        cap = getattr(info, "vmem_capacity_bytes", None)
    except Exception:
        cap = None
    if cap is None:
        cap = 64 * 1024 * 1024                      # conservative (v7x per-TC)
    if cap >= 100 * 1024 * 1024:                    # v5e / v6e
        return 64 * 1024 * 1024, 4096
    return 32 * 1024 * 1024, 2048                   # v7x


def _pick_j_tile(J, cap):
    """Largest multiple-of-128 tile that divides J (no HBM padding of the big
    operand) while keeping >= 2 tiles when J >= 256 (both v7x TCs get work)."""
    limit = min(cap, J)
    if J >= 256:
        limit = min(limit, J // 2)
    limit = max(128, (limit // 128) * 128)
    for tn in range(limit, 127, -128):
        if J % tn == 0:
            return tn, J                            # exact split, no padding
    return limit, _round_up(J, limit)               # rare fallback: pad J


def pallas_wsmall_matmul(a, b, out_dtype=jnp.float32):
    """(M, K) @ (K, J) with J (pixels) on the lane axis of the output."""
    M, K = a.shape
    K2, J = b.shape
    assert K == K2, (a.shape, b.shape)
    assert M <= 512, "M (channel count) is expected to be small here"

    vmem_limit, tn_cap = _vmem_budget_and_tile_cap()

    # K: resident single block when small (always the case for this module);
    # 512-wide tiles with f32 accumulation otherwise.
    if K <= 1024:
        tk, Kp = K, K
    else:
        tk = 512
        Kp = _round_up(K, tk)

    tn, Jp = _pick_j_tile(J, tn_cap)

    a_p = a if Kp == K else jnp.pad(a, ((0, 0), (0, Kp - K)))
    b_p = b if (Kp == K and Jp == J) else jnp.pad(b, ((0, Kp - K), (0, Jp - J)))

    grid = (Jp // tn, Kp // tk)
    flops = 2 * M * Kp * Jp
    bytes_accessed = (a_p.size * a_p.dtype.itemsize
                      + b_p.size * b_p.dtype.itemsize
                      + M * Jp * jnp.dtype(out_dtype).itemsize)

    out = pl.pallas_call(
        _wsmall_matmul_kernel,
        out_shape=jax.ShapeDtypeStruct((M, Jp), out_dtype),
        grid_spec=pltpu.PrefetchScalarGridSpec(
            num_scalar_prefetch=0,
            grid=grid,
            in_specs=[
                pl.BlockSpec((M, tk), lambda j, k: (0, k)),   # weights: resident
                pl.BlockSpec((tk, tn), lambda j, k: (k, j)),  # pixels: streamed
            ],
            out_specs=pl.BlockSpec((M, tn), lambda j, k: (0, j)),
            scratch_shapes=[pltpu.VMEM((M, tn), jnp.float32)],
        ),
        compiler_params=pltpu.CompilerParams(
            dimension_semantics=("parallel", "arbitrary"),
            vmem_limit_bytes=vmem_limit,
        ),
        cost_estimate=pl.CostEstimate(
            flops=flops, transcendentals=0, bytes_accessed=bytes_accessed),
    )(a_p, b_p)
    return out if Jp == J else out[:, :J]


# ---------------------------------------------------------------------------
# Upsample-folding: 2x nearest upsample + pad(1,2,1,2) + 4x4 conv
#   == four 3x3 parity sub-kernels on the original-resolution input
#      (padded by 1 on every side), pixel-shuffled afterwards.  Exact.
# ---------------------------------------------------------------------------

def _fold_upsample_conv1_weights(w1_hwio):
    """Returns A1 (4*Cout, 9*Cin); rows = (qy, qx, co), cols = (ey, ex, ci)."""
    Cin, Cout = w1_hwio.shape[2], w1_hwio.shape[3]
    # parity fold matrices: f[q, e, d] = 1 iff tap d lands on effective tap e.
    f = jnp.array(
        [[[1, 0, 0, 0], [0, 1, 1, 0], [0, 0, 0, 1]],     # even output rows/cols
         [[0, 0, 0, 0], [1, 1, 0, 0], [0, 0, 1, 1]]],    # odd  output rows/cols
        dtype=w1_hwio.dtype)
    keff = jnp.einsum('yad,xbe,deio->yxabio', f, f, w1_hwio)   # (2,2,3,3,Cin,Cout)
    return jnp.transpose(keff, (0, 1, 5, 2, 3, 4)).reshape(4 * Cout, 9 * Cin)


# ---------------------------------------------------------------------------
# Deconv forward (Pallas) and pure-XLA reference
# ---------------------------------------------------------------------------

def deconv_forward(params, x_nchw):
    """Deconv.forward: NCHW in -> NCHW out (spatial doubled, Cout channels)."""
    w1, w2 = params                                  # HWIO (4,4,Cin,Cout), (4,4,Cout,Cout)
    Cin, Cout = w1.shape[2], w1.shape[3]
    N, C, H, W = x_nchw.shape
    assert C == Cin

    # channels-first activations (C, N, H, W): pixel axis stays minor/lane-dense.
    xcf = jnp.transpose(x_nchw, (1, 0, 2, 3)).astype(jnp.bfloat16)

    # ---- layer 1: upsample folded into 4 parity 3x3 sub-kernels (one matmul).
    a1 = _fold_upsample_conv1_weights(w1).astype(jnp.bfloat16)       # (4*Cout, 9*Cin)
    xp1 = jnp.pad(xcf, ((0, 0), (0, 0), (1, 1), (1, 1)))
    cols1 = jnp.concatenate(
        [xp1[:, :, ey:ey + H, ex:ex + W] for ey in range(3) for ex in range(3)],
        axis=0).reshape(9 * Cin, N * H * W)
    o1 = pallas_wsmall_matmul(a1, cols1, out_dtype=jnp.bfloat16)     # (4*Cout, NHW)

    # pixel-shuffle the 4 parities -> channels-first (Cout, N, 2H, 2W), bf16.
    h1 = o1.reshape(2, 2, Cout, N, H, W)                             # (qy,qx,co,n,oy,ox)
    h1 = jnp.transpose(h1, (2, 3, 4, 0, 5, 1)).reshape(Cout, N, 2 * H, 2 * W)

    # ---- layer 2: pad (top1,bot2,left1,right2) + 4x4 conv as one matmul.
    # TODO(synk): 16-tap im2col still materialized by XLA (16x of the bf16
    # intermediate); move it in-kernel (haloed row tiles + manual DMA, P4).
    H2, W2 = 2 * H, 2 * W
    a2 = jnp.transpose(w2, (3, 0, 1, 2)).reshape(Cout, 16 * Cout).astype(jnp.bfloat16)
    hp = jnp.pad(h1, ((0, 0), (0, 0), (1, 2), (1, 2)))
    cols2 = jnp.concatenate(
        [hp[:, :, dy:dy + H2, dx:dx + W2] for dy in range(4) for dx in range(4)],
        axis=0).reshape(16 * Cout, N * H2 * W2)
    o2 = pallas_wsmall_matmul(a2, cols2, out_dtype=jnp.float32)      # (Cout, N*4HW)

    out = o2.reshape(Cout, N, H2, W2)
    return jnp.transpose(out, (1, 0, 2, 3))                          # -> NCHW


def _upsample2x_nearest(x_nhwc):
    N, H, W, C = x_nhwc.shape
    up = jnp.broadcast_to(x_nhwc[:, :, None, :, None, :], (N, H, 2, W, 2, C))
    return up.reshape(N, 2 * H, 2 * W, C)


def deconv_reference(params, x_nchw):
    """Pure-XLA reference of the ORIGINAL module semantics, with the same bf16
    casting points as the Pallas path (bf16 MXU inputs, bf16 inter-layer)."""
    w1, w2 = params
    x = jnp.transpose(x_nchw, (0, 2, 3, 1))
    h = _upsample2x_nearest(x)

    def conv(h, w):
        hp = jnp.pad(h, ((0, 0), (1, 2), (1, 2), (0, 0))).astype(jnp.bfloat16)
        return lax.conv_general_dilated(
            hp, w.astype(jnp.bfloat16),
            window_strides=(1, 1), padding="VALID",
            dimension_numbers=("NHWC", "HWIO", "NHWC"),
            preferred_element_type=jnp.float32)

    h = conv(h, w1)
    h = h.astype(jnp.bfloat16)          # keep in sync with the bf16 intermediate
    h = conv(h, w2)
    return jnp.transpose(h, (0, 3, 1, 2))


# ---------------------------------------------------------------------------
# Deterministic parameters (PyTorch Conv2d-like init, stored as HWIO)
# ---------------------------------------------------------------------------

def init_deconv_params(key, input_channel, output_channel):
    def init(k, cin, cout):
        bound = 1.0 / float((cin * 16) ** 0.5)       # ~ kaiming_uniform fan_in bound
        w_oihw = jax.random.uniform(k, (cout, cin, 4, 4), jnp.float32,
                                    minval=-bound, maxval=bound)
        return jnp.transpose(w_oihw, (2, 3, 1, 0))   # OIHW -> HWIO
    k1, k2 = jax.random.split(key)
    return (init(k1, input_channel, output_channel),
            init(k2, output_channel, output_channel))


if __name__ == "__main__":
    key = jax.random.PRNGKey(0)
    kp, kx = jax.random.split(key)

    in_ch, out_ch = 4, 8
    params = init_deconv_params(kp, in_ch, out_ch)
    x = jax.random.normal(kx, (2, in_ch, 16, 16), jnp.float32)       # NCHW

    out = jax.jit(deconv_forward)(params, x)
    jax.block_until_ready(out)
    assert out.shape == (2, out_ch, 32, 32), out.shape
    assert bool(jnp.all(jnp.isfinite(out))), "non-finite output"

    ref = jax.jit(deconv_reference)(params, x)
    jax.block_until_ready(ref)
    max_ref = float(jnp.max(jnp.abs(ref)))
    err = float(jnp.max(jnp.abs(out - ref)))
    # Relative/K-scaled tolerance: the folded conv1 weights are summed in f32
    # before the bf16 cast, so tiny bf16 rounding differences vs the reference
    # are expected; real indexing bugs produce O(1) errors.
    tol = 1e-2 + 3e-2 * max_ref
    assert err < tol, f"mismatch vs XLA reference: max abs err = {err} (tol {tol})"

    print("KERNEL_OK")
</pallas_src>

<mosaic_0001>
module attributes {stable_mosaic.version = 11 : i64} {
  func.func @_wsmall_matmul_kernel(%arg0: i32, %arg1: i32, %arg2: memref<32x36xbf16, #tpu.memory_space<vmem>>, %arg3: memref<36x256xbf16, #tpu.memory_space<vmem>>, %arg4: memref<32x256xbf16, #tpu.memory_space<vmem>>, %arg5: memref<32x256xf32, #tpu.memory_space<vmem>>) attributes {dimension_semantics = [#tpu.dimension_semantics<parallel>, #tpu.dimension_semantics<arbitrary>], iteration_bounds = array<i64: 2, 1>, scalar_prefetch = 0 : i64, scratch_operands = 1 : i64, tpu.core_type = #tpu.core_type<tc>, window_params = [{transform_indices = @transform_0, window_bounds = array<i64: 32, 36>}, {transform_indices = @transform_1, window_bounds = array<i64: 36, 256>}, {transform_indices = @transform_2, window_bounds = array<i64: 32, 256>}]} {
    %c0_i32 = arith.constant 0 : i32
    %0 = arith.cmpi eq, %arg1, %c0_i32 : i32
    %1 = arith.extui %0 : i1 to i32
    %c0_i32_0 = arith.constant 0 : i32
    %2 = arith.cmpi ne, %1, %c0_i32_0 : i32
    scf.if %2 {
      %cst_10 = arith.constant 0.000000e+00 : f32
      %12 = vector.broadcast %cst_10 : f32 to vector<32x256xf32>
      %c0_11 = arith.constant 0 : index
      %c0_12 = arith.constant 0 : index
      %13 = vector.load %arg5[%c0_11, %c0_12] : memref<32x256xf32, #tpu.memory_space<vmem>>, vector<32x256xf32>
      tpu.vector_store %arg5[%c0_11, %c0_12], %12 {strides = array<i32>} : memref<32x256xf32, #tpu.memory_space<vmem>>, vector<32x256xf32>,
    } else {
    }
    %c0 = arith.constant 0 : index
    %c0_1 = arith.constant 0 : index
    %3 = vector.load %arg5[%c0, %c0_1] : memref<32x256xf32, #tpu.memory_space<vmem>>, vector<32x256xf32>
    %c0_2 = arith.constant 0 : index
    %c0_3 = arith.constant 0 : index
    %4 = vector.load %arg2[%c0_2, %c0_3] : memref<32x36xbf16, #tpu.memory_space<vmem>>, vector<32x36xbf16>
    %c0_4 = arith.constant 0 : index
    %c0_5 = arith.constant 0 : index
    %5 = vector.load %arg3[%c0_4, %c0_5] : memref<36x256xbf16, #tpu.memory_space<vmem>>, vector<36x256xbf16>
    %cst = arith.constant dense<0.000000e+00> : vector<32x256xf32>
    %6 = tpu.matmul %4, %5, %cst {dimension_numbers = #tpu.dot_dimension_numbers<[1], [0], [0], [1], [0, 0, 1, 1], [], []>} : vector<32x36xbf16>, vector<36x256xbf16>, vector<32x256xf32> -> vector<32x256xf32>
    %7 = arith.addf %3, %6 : vector<32x256xf32>
    %c0_6 = arith.constant 0 : index
    %c0_7 = arith.constant 0 : index
    %8 = vector.load %arg5[%c0_6, %c0_7] : memref<32x256xf32, #tpu.memory_space<vmem>>, vector<32x256xf32>
    tpu.vector_store %arg5[%c0_6, %c0_7], %7 {strides = array<i32>} : memref<32x256xf32, #tpu.memory_space<vmem>>, vector<32x256xf32>,
    %c0_i32_8 = arith.constant 0 : i32
    %9 = arith.cmpi eq, %arg1, %c0_i32_8 : i32
    %10 = arith.extui %9 : i1 to i32
    %c0_i32_9 = arith.constant 0 : i32
    %11 = arith.cmpi ne, %10, %c0_i32_9 : i32
    scf.if %11 {
      %c0_10 = arith.constant 0 : index
      %c0_11 = arith.constant 0 : index
      %12 = vector.load %arg5[%c0_10, %c0_11] : memref<32x256xf32, #tpu.memory_space<vmem>>, vector<32x256xf32>
      %13 = arith.truncf %12 : vector<32x256xf32> to vector<32x256xbf16>
      %c0_12 = arith.constant 0 : index
      %c0_13 = arith.constant 0 : index
      %14 = vector.load %arg4[%c0_12, %c0_13] : memref<32x256xbf16, #tpu.memory_space<vmem>>, vector<32x256xbf16>
      tpu.vector_store %arg4[%c0_12, %c0_13], %13 {strides = array<i32>} : memref<32x256xbf16, #tpu.memory_space<vmem>>, vector<32x256xbf16>,
    } else {
    }
    return
  }
  func.func @transform_0(%arg0: i32, %arg1: i32) -> (i32, i32) {
    %c0_i32 = arith.constant 0 : i32
    %c0_i32_0 = arith.constant 0 : i32
    return %c0_i32, %arg1 : i32, i32
  }
  func.func @transform_1(%arg0: i32, %arg1: i32) -> (i32, i32) {
    %c0_i32 = arith.constant 0 : i32
    return %arg1, %arg0 : i32, i32
  }
  func.func @transform_2(%arg0: i32, %arg1: i32) -> (i32, i32) {
    %c0_i32 = arith.constant 0 : i32
    %c0_i32_0 = arith.constant 0 : i32
    return %c0_i32, %arg0 : i32, i32
  }
}

module attributes {stable_mosaic.version = 11 : i64} {
  func.func @_wsmall_matmul_kernel(%arg0: i32, %arg1: i32, %arg2: memref<8x128xbf16, #tpu.memory_space<vmem>>, %arg3: memref<128x1024xbf16, #tpu.memory_space<vmem>>, %arg4: memref<8x1024xf32, #tpu.memory_space<vmem>>, %arg5: memref<8x1024xf32, #tpu.memory_space<vmem>>) attributes {dimension_semantics = [#tpu.dimension_semantics<parallel>, #tpu.dimension_semantics<arbitrary>], iteration_bounds = array<i64: 2, 1>, scalar_prefetch = 0 : i64, scratch_operands = 1 : i64, tpu.core_type = #tpu.core_type<tc>, window_params = [{transform_indices = @transform_0, window_bounds = array<i64: 8, 128>}, {transform_indices = @transform_1, window_bounds = array<i64: 128, 1024>}, {transform_indices = @transform_2, window_bounds = array<i64: 8, 1024>}]} {
    %c0_i32 = arith.constant 0 : i32
    %0 = arith.cmpi eq, %arg1, %c0_i32 : i32
    %1 = arith.extui %0 : i1 to i32
    %c0_i32_0 = arith.constant 0 : i32
    %2 = arith.cmpi ne, %1, %c0_i32_0 : i32
    scf.if %2 {
      %cst_10 = arith.constant 0.000000e+00 : f32
      %12 = vector.broadcast %cst_10 : f32 to vector<8x1024xf32>
      %c0_11 = arith.constant 0 : index
      %c0_12 = arith.constant 0 : index
      %13 = vector.load %arg5[%c0_11, %c0_12] : memref<8x1024xf32, #tpu.memory_space<vmem>>, vector<8x1024xf32>
      tpu.vector_store %arg5[%c0_11, %c0_12], %12 {strides = array<i32>} : memref<8x1024xf32, #tpu.memory_space<vmem>>, vector<8x1024xf32>,
    } else {
    }
    %c0 = arith.constant 0 : index
    %c0_1 = arith.constant 0 : index
    %3 = vector.load %arg5[%c0, %c0_1] : memref<8x1024xf32, #tpu.memory_space<vmem>>, vector<8x1024xf32>
    %c0_2 = arith.constant 0 : index
    %c0_3 = arith.constant 0 : index
    %4 = vector.load %arg2[%c0_2, %c0_3] : memref<8x128xbf16, #tpu.memory_space<vmem>>, vector<8x128xbf16>
    %c0_4 = arith.constant 0 : index
    %c0_5 = arith.constant 0 : index
    %5 = vector.load %arg3[%c0_4, %c0_5] : memref<128x1024xbf16, #tpu.memory_space<vmem>>, vector<128x1024xbf16>
    %cst = arith.constant dense<0.000000e+00> : vector<8x1024xf32>
    %6 = tpu.matmul %4, %5, %cst {dimension_numbers = #tpu.dot_dimension_numbers<[1], [0], [0], [1], [0, 0, 1, 1], [], []>} : vector<8x128xbf16>, vector<128x1024xbf16>, vector<8x1024xf32> -> vector<8x1024xf32>
    %7 = arith.addf %3, %6 : vector<8x1024xf32>
    %c0_6 = arith.constant 0 : index
    %c0_7 = arith.constant 0 : index
    %8 = vector.load %arg5[%c0_6, %c0_7] : memref<8x1024xf32, #tpu.memory_space<vmem>>, vector<8x1024xf32>
    tpu.vector_store %arg5[%c0_6, %c0_7], %7 {strides = array<i32>} : memref<8x1024xf32, #tpu.memory_space<vmem>>, vector<8x1024xf32>,
    %c0_i32_8 = arith.constant 0 : i32
    %9 = arith.cmpi eq, %arg1, %c0_i32_8 : i32
    %10 = arith.extui %9 : i1 to i32
    %c0_i32_9 = arith.constant 0 : i32
    %11 = arith.cmpi ne, %10, %c0_i32_9 : i32
    scf.if %11 {
      %c0_10 = arith.constant 0 : index
      %c0_11 = arith.constant 0 : index
      %12 = vector.load %arg5[%c0_10, %c0_11] : memref<8x1024xf32, #tpu.memory_space<vmem>>, vector<8x1024xf32>
      %c0_12 = arith.constant 0 : index
      %c0_13 = arith.constant 0 : index
      %13 = vector.load %arg4[%c0_12, %c0_13] : memref<8x1024xf32, #tpu.memory_space<vmem>>, vector<8x1024xf32>
      tpu.vector_store %arg4[%c0_12, %c0_13], %12 {strides = array<i32>} : memref<8x1024xf32, #tpu.memory_space<vmem>>, vector<8x1024xf32>,
    } else {
    }
    return
  }
  func.func @transform_0(%arg0: i32, %arg1: i32) -> (i32, i32) {
    %c0_i32 = arith.constant 0 : i32
    %c0_i32_0 = arith.constant 0 : i32
    return %c0_i32, %arg1 : i32, i32
  }
  func.func @transform_1(%arg0: i32, %arg1: i32) -> (i32, i32) {
    %c0_i32 = arith.constant 0 : i32
    return %arg1, %arg0 : i32, i32
  }
  func.func @transform_2(%arg0: i32, %arg1: i32) -> (i32, i32) {
    %c0_i32 = arith.constant 0 : i32
    %c0_i32_0 = arith.constant 0 : i32
    return %c0_i32, %arg0 : i32, i32
  }
}

</mosaic_0001>

<llo_original>
// kernel: deconv_forward.2
$region0: #{deconv_forward.2}
  #allocation0 [shape = 'u32[]', space=smem, size = 0x4, offset = 0x4, fixed_abs, tag = 'smem constant byte address 0x4 - core index']
  #allocation1 [shape = 'u32[72,128]{1,0:T(1,128)}', space=vmem, size = 0x9000, scoped, tag = 'internal scratch']
  #allocation2 [shape = 'f32[32,256]{1,0:T(8,128)}', space=vmem, size = 0x8000, scoped, tag = 'scratch operand']
  %s0 = inlined_call_operand.vmem [shape: bf16[32,36], index: 0, kind: input, shape index: {}]
  %s1 = inlined_call_operand.vmem [shape: bf16[36,512], index: 1, kind: input, shape index: {}]
  %s2 = inlined_call_operand.vmem [shape: bf16[32,512], index: 2, kind: output, shape index: {}]
  %s3 = sld [smem:[#allocation0]]
  $region121: #{deconv_forward.2} parent=0
    _
  %s5 = ssub.s32 1, %s3
  %s6 = scalar_select 0, %s5, %s3
  $region1: #{deconv_forward.2} parent=0
    #allocation3 [shape = 'u8[40960]{0}', space=vmem, size = 0xa000, scoped, tag = 'input window, operand 1']
    #allocation4 [shape = 'u8[32768]{0}', space=vmem, size = 0x8000, scoped, tag = 'output window, operand 0']
    loop: start=0, step=1, limit=4
    $region2: #{deconv_forward.2} parent=1 // loop_pre_header
      _
    $region3: #{deconv_forward.2} parent=1 // loop_header
      %s8 = sphi 0, %s12
      %p9 = scmp.ge.s32.totalorder %s8, 4
      %s15 = sphi 0, %s27
      %s16 = sphi 0, %s23
      %s17 = sphi 0, %s15
      %s18 = sphi 0, %s16
      %s19 = sphi 0, %s17
      %s20 = sphi 0, %s18
      %s30 = sphi 0, %s32
      %s33 = sphi 0, %s30
      %s34 = sphi 0, %s33
      %s50 = sphi 0, %s34
      %s58 = sphi 0, %s60
      %s61 = sphi 0, %s58
      %s62 = sphi 0, %s61
      %s78 = sphi 0, %s62
      %s84 = sphi 0, %s86
      %s87 = sphi 0, %s84
      %s88 = sphi 0, %s87
      %s104 = sphi 0, %s88
    $region4: #{deconv_forward.2} parent=1 // loop_header_branch
      %11 = sbr.rel (%p9) target = $region8
    $region5: #{deconv_forward.2} parent=1 // loop_body
      %s13 = ssub.s32 %s8, 1
      %s14 = ssub.s32 %s8, 2
      %s21 = sadd.s32 1, %s16
      %p22 = scmp.ge.s32.totalorder %s21, 1
      %s23 = scalar_select %p22, 0, %s21
      %s24 = sadd.s32 1, %s15
      %s25 = scalar_select %p22, %s24, %s15
      %p26 = scmp.ge.s32.totalorder %s25, 2
      %s27 = scalar_select %p26, 0, %s25
      %s28 = ssub.s32 %s16, %s23
      %p29 = scmp.eq.s32.totalorder %s28, 0
      %s31 = sadd.s32 %s30, 1
      %s32 = scalar_select %p29, %s30, %s31
      %p35 = pneg %p29
      %p36 = scmp.eq.s32.totalorder %s8, 1
      %p37 = por %p35, %p36
      %p38 = scmp.ne.s32.totalorder %s30, %s33
      %p39 = scmp.eq.s32.totalorder %s8, 0
      %p40 = por %p38, %p39
      %p41 = scmp.ne.s32.totalorder %s30, %s33
      %p42 = scmp.eq.s32.totalorder %s13, 1
      %p43 = por %p41, %p42
      %p44 = scmp.ne.s32.totalorder %s33, %s34
      %p45 = scmp.eq.s32.totalorder %s13, 0
      %p46 = por %p44, %p45
      %p47 = scmp.ne.s32.totalorder %s33, %s34
      %p48 = scmp.eq.s32.totalorder %s14, 1
      %p49 = por %p47, %p48
      %p51 = scmp.ne.s32.totalorder %s34, %s50
      %p52 = scmp.eq.s32.totalorder %s14, 0
      %p53 = por %p51, %p52
      %s54 = ssub.s32 %s16, %s23
      %s55 = ssub.s32 %s15, %s27
      %s56 = sor.u32 %s54, %s55
      %p57 = scmp.eq.s32.totalorder %s56, 0
      %s59 = sadd.s32 %s58, 1
      %s60 = scalar_select %p57, %s58, %s59
      %p63 = pneg %p57
      %p64 = scmp.eq.s32.totalorder %s8, 1
      %p65 = por %p63, %p64
      %p66 = scmp.ne.s32.totalorder %s58, %s61
      %p67 = scmp.eq.s32.totalorder %s8, 0
      %p68 = por %p66, %p67
      %p69 = scmp.ne.s32.totalorder %s58, %s61
      %p70 = scmp.eq.s32.totalorder %s13, 1
      %p71 = por %p69, %p70
      %p72 = scmp.ne.s32.totalorder %s61, %s62
      %p73 = scmp.eq.s32.totalorder %s13, 0
      %p74 = por %p72, %p73
      %p75 = scmp.ne.s32.totalorder %s61, %s62
      %p76 = scmp.eq.s32.totalorder %s14, 1
      %p77 = por %p75, %p76
      %p79 = scmp.ne.s32.totalorder %s62, %s78
      %p80 = scmp.eq.s32.totalorder %s14, 0
      %p81 = por %p79, %p80
      %s82 = ssub.s32 %s15, %s27
      %p83 = scmp.eq.s32.totalorder %s82, 0
      %s85 = sadd.s32 %s84, 1
      %s86 = scalar_select %p83, %s84, %s85
      %p89 = pneg %p83
      %p90 = scmp.eq.s32.totalorder %s8, 1
      %p91 = por %p89, %p90
      %p92 = scmp.ne.s32.totalorder %s84, %s87
      %p93 = scmp.eq.s32.totalorder %s8, 0
      %p94 = por %p92, %p93
      %p95 = scmp.ne.s32.totalorder %s84, %s87
      %p96 = scmp.eq.s32.totalorder %s13, 1
      %p97 = por %p95, %p96
      %p98 = scmp.ne.s32.totalorder %s87, %s88
      %p99 = scmp.eq.s32.totalorder %s13, 0
      %p100 = por %p98, %p99
      %p101 = scmp.ne.s32.totalorder %s87, %s88
      %p102 = scmp.eq.s32.totalorder %s14, 1
      %p103 = por %p101, %p102
      %p105 = scmp.ne.s32.totalorder %s88, %s104
      %p106 = scmp.eq.s32.totalorder %s14, 0
      %p107 = por %p105, %p106
      %p108 = scmp.le.s32.totalorder 1, %s8
      %p109 = scmp.lt.s32.totalorder %s8, 3
      %p110 = pnand %p108, %p109
      %p111 = pneg %p110
      // Predicated region
      $region9: #{deconv_forward.2} parent=5 // pred_check
        _
      $region10: #{deconv_forward.2} parent=5 // pred_check_branch
        %113 = sbr.rel (%p110) target = $region12
      $region11: #{deconv_forward.2} parent=5 // pred_region
        %s114 = ssub.s32 %s8, 1
        // Predicated region
        $region13: #{deconv_forward.2} parent=11 // pred_check
          %p115 = pneg %p46
        $region14: #{deconv_forward.2} parent=11 // pred_check_branch
          %117 = sbr.rel (%p115) target = $region16
        $region15: #{deconv_forward.2} parent=11 // pred_region
          %p118 = scmp.lt.s32.totalorder %s18, 0
          %s119 = scalar_select %p118, %s18, 0
          %s120 = smul.addr %s119, 4
          %s121 = scalar_lea.vmem %s0, %s120
        $region16: #{deconv_forward.2} parent=11 // pred_fallthru
          _
      $region12: #{deconv_forward.2} parent=5 // pred_fallthru
        _
      %p122 = scmp.lt.s32.totalorder %s8, 2
      // Predicated region
      $region17: #{deconv_forward.2} parent=5 // pred_check
        %p123 = pneg %p122
      $region18: #{deconv_forward.2} parent=5 // pred_check_branch
        %125 = sbr.rel (%p123) target = $region20
      $region19: #{deconv_forward.2} parent=5 // pred_region
        // Predicated region
        $region21: #{deconv_forward.2} parent=19 // pred_check
          %p126 = pneg %p68
        $region22: #{deconv_forward.2} parent=19 // pred_check_branch
          %128 = sbr.rel (%p126) target = $region24
        $region23: #{deconv_forward.2} parent=19 // pred_region
          %s129 = sand.u32 %s58, 1
          %s130 = sand.u32 %s58, 1
          %s131 = smul.addr %s130, 40
          %s132 = scalar_lea.vmem [#allocation3], %s131
          %s133 = smul.u32 5, %s16
          %s134 = smul.u32 2, %s15
          %s135 = smul.addr %s133, 4
          %s136 = sadd.s32 %s134, %s135
          %s137 = smul.addr %s136, 4
          %s138 = scalar_lea.vmem %s1, %s137
          // Predicated region
          $region25: #{deconv_forward.2} parent=23 // pred_check
            _
          $region26: #{deconv_forward.2} parent=23 // pred_check_branch
            %140 = sbr.rel (0) target = $region28
          $region27: #{deconv_forward.2} parent=23 // pred_region
            // Predicated region
            $region29: #{deconv_forward.2} parent=27 // pred_check
              _
            $region30: #{deconv_forward.2} parent=27 // pred_check_branch
              %142 = sbr.rel (0) target = $region32
            $region31: #{deconv_forward.2} parent=27 // pred_region
              // Predicated region
              $region44: #{deconv_forward.2} parent=31 // pred_check
                _
              $region45: #{deconv_forward.2} parent=31 // pred_check_branch
                %166 = sbr.rel (0) target = $region47
              $region46: #{deconv_forward.2} parent=31 // pred_region
                loop: start=0, step=1, limit=1
                $region48: #{deconv_forward.2} parent=46 // loop_pre_header
                  _
                $region49: #{deconv_forward.2} parent=46 // loop_header
                  %s168 = sphi 0, %s172
                  %p169 = scmp.ge.s32.totalorder %s168, 1
                  %s173 = sphi %s138, %s138
                  %s174 = sphi %s132, %s132
                $region50: #{deconv_forward.2} parent=46 // loop_header_branch
                  %171 = sbr.rel (%p169) target = $region54
                $region51: #{deconv_forward.2} parent=46 // loop_body
                  %v175 = vld [vmem:[%s173] sm:$0xff]
                  %176 = vst [vmem:[%s174] sm:$0xff] %v175
                  %v177 = vld [vmem:[%s173 + $0x10] sm:$0xff]
                  %178 = vst [vmem:[%s174 + $0x8] sm:$0xff] %v177
                  %v179 = vld [vmem:[%s173 + $0x20] sm:$0xff]
                  %180 = vst [vmem:[%s174 + $0x10] sm:$0xff] %v179
                  %v181 = vld [vmem:[%s173 + $0x30] sm:$0xff]
                  %182 = vst [vmem:[%s174 + $0x18] sm:$0xff] %v181
                  %v183 = vld [vmem:[%s173 + $0x40] sm:$0xff]
                  %184 = vst [vmem:[%s174 + $0x20] sm:$0xff] %v183
                $region52: #{deconv_forward.2} parent=46 // loop_footer
                  %s172 = sadd.s32 1, %s168
                $region53: #{deconv_forward.2} parent=46 // loop_footer_branch
                  %167 = sbr.rel target = $region49
                $region54: #{deconv_forward.2} parent=46 // loop_exit
                  _
              $region47: #{deconv_forward.2} parent=31 // pred_fallthru
                _
              // Predicated region
              $region55: #{deconv_forward.2} parent=31 // pred_check
                _
              $region56: #{deconv_forward.2} parent=31 // pred_check_branch
                %186 = sbr.rel target = $region58
              $region57: #{deconv_forward.2} parent=31 // pred_region
                _
              $region58: #{deconv_forward.2} parent=31 // pred_fallthru
                _
            $region32: #{deconv_forward.2} parent=27 // pred_fallthru
              _
            // Predicated region
            $region33: #{deconv_forward.2} parent=27 // pred_check
              _
            $region34: #{deconv_forward.2} parent=27 // pred_check_branch
              %144 = sbr.rel target = $region36
            $region35: #{deconv_forward.2} parent=27 // pred_region
              %s146 = ssub.s32 256, 1
              loop: start=0, step=1, limit=1
              $region37: #{deconv_forward.2} parent=35 // loop_pre_header
                _
              $region38: #{deconv_forward.2} parent=35 // loop_header
                %s148 = sphi 0, %s152
                %p149 = scmp.ge.s32.totalorder %s148, 1
                %s153 = sphi %s138, %s138
                %s154 = sphi %s132, %s132
              $region39: #{deconv_forward.2} parent=35 // loop_header_branch
                %151 = sbr.rel (%p149) target = $region43
              $region40: #{deconv_forward.2} parent=35 // loop_body
                %v155 = vld [vmem:[%s153] sm:%s146]
                %156 = vst [vmem:[%s154] sm:%s146] %v155
                %v157 = vld [vmem:[%s153 + $0x10] sm:%s146]
                %158 = vst [vmem:[%s154 + $0x8] sm:%s146] %v157
                %v159 = vld [vmem:[%s153 + $0x20] sm:%s146]
                %160 = vst [vmem:[%s154 + $0x10] sm:%s146] %v159
                %v161 = vld [vmem:[%s153 + $0x30] sm:%s146]
                %162 = vst [vmem:[%s154 + $0x18] sm:%s146] %v161
                %v163 = vld [vmem:[%s153 + $0x40] sm:%s146]
                %164 = vst [vmem:[%s154 + $0x20] sm:%s146] %v163
              $region41: #{deconv_forward.2} parent=35 // loop_footer
                %s152 = sadd.s32 1, %s148
              $region42: #{deconv_forward.2} parent=35 // loop_footer_branch
                %147 = sbr.rel target = $region38
              $region43: #{deconv_forward.2} parent=35 // loop_exit
                _
            $region36: #{deconv_forward.2} parent=27 // pred_fallthru
              _
          $region28: #{deconv_forward.2} parent=23 // pred_fallthru
            _
          %187 = vnop
        $region24: #{deconv_forward.2} parent=19 // pred_fallthru
          _
      $region20: #{deconv_forward.2} parent=5 // pred_fallthru
        _
      %p188 = scmp.le.s32.totalorder 1, %s8
      %p189 = scmp.lt.s32.totalorder %s8, 3
      %p190 = pnand %p188, %p189
      %p191 = pneg %p190
      // Predicated region
      $region59: #{deconv_forward.2} parent=5 // pred_check
        _
      $region60: #{deconv_forward.2} parent=5 // pred_check_branch
        %193 = sbr.rel (%p190) target = $region62
      $region61: #{deconv_forward.2} parent=5 // pred_region
        %s194 = ssub.s32 %s8, 1
        %s195 = sand.u32 %s61, 1
        %s196 = sand.u32 %s61, 1
        %s197 = smul.addr %s196, 40
        %s198 = scalar_lea.vmem [#allocation3], %s197
        // Predicated region
        $region63: #{deconv_forward.2} parent=61 // pred_check
          %p199 = pneg %p74
        $region64: #{deconv_forward.2} parent=61 // pred_check_branch
          %201 = sbr.rel (%p199) target = $region66
        $region65: #{deconv_forward.2} parent=61 // pred_region
          _
        $region66: #{deconv_forward.2} parent=61 // pred_fallthru
          _
        %p202 = scmp.lt.s32.totalorder %s18, 0
        %s203 = scalar_select %p202, %s18, 0
        %s204 = smul.addr %s203, 4
        %s205 = scalar_lea.vmem %s0, %s204
        %p206 = pneg %p46
        %p207 = pneg %p43
        %s208 = sand.u32 %s61, 1
        %s209 = sand.u32 %s61, 1
        %s210 = smul.addr %s209, 40
        %s211 = scalar_lea.vmem [#allocation3], %s210
        %p212 = pneg %p74
        %p213 = pneg %p71
        %p214 = pneg %p100
        %p215 = pneg %p97
        %s216 = sand.u32 %s87, 1
        %s217 = sand.u32 %s87, 1
        %s218 = smul.addr %s217, 32
        %s219 = scalar_lea.vmem [#allocation4], %s218
        %p220 = scmp.lt.s32.totalorder %s18, 0
        %s221 = scalar_select %p220, %s18, 0
        %s222 = smul.addr %s221, 4
        %s223 = scalar_lea.vmem %s0, %s222
        %s224 = smul.u32 5, %s18
        %s225 = smul.u32 2, %s17
        %s226 = smul.u32 2, %s17
        %p228 = scmp.eq.s32.totalorder %s18, 0
        // Predicated region
        $region67: #{deconv_forward.2} parent=61 // pred_check
          %p229 = pneg %p228
        $region68: #{deconv_forward.2} parent=61 // pred_check_branch
          %231 = sbr.rel (%p229) target = $region70
        $region69: #{deconv_forward.2} parent=61 // pred_region
          %232 = vst [vmem:[#allocation2] sm:$0xff] 0.0
          %233 = vst [vmem:[#allocation2 + $0x8] sm:$0xff] 0.0
          %234 = vst [vmem:[#allocation2 + $0x10] sm:$0xff] 0.0
          %235 = vst [vmem:[#allocation2 + $0x18] sm:$0xff] 0.0
          %236 = vst [vmem:[#allocation2 + $0x20] sm:$0xff] 0.0
          %237 = vst [vmem:[#allocation2 + $0x28] sm:$0xff] 0.0
          %238 = vst [vmem:[#allocation2 + $0x30] sm:$0xff] 0.0
          %239 = vst [vmem:[#allocation2 + $0x38] sm:$0xff] 0.0
        $region70: #{deconv_forward.2} parent=61 // pred_fallthru
          _
        %v240 = vld [vmem:[#allocation2] sm:$0xff]
        %v241 = vld [vmem:[#allocation2 + $0x8] sm:$0xff]
        %v242 = vld [vmem:[#allocation2 + $0x10] sm:$0xff]
        %v243 = vld [vmem:[#allocation2 + $0x18] sm:$0xff]
        %v244 = vld [vmem:[#allocation2 + $0x20] sm:$0xff]
        %v245 = vld [vmem:[#allocation2 + $0x28] sm:$0xff]
        %v246 = vld [vmem:[#allocation2 + $0x30] sm:$0xff]
        %v247 = vld [vmem:[#allocation2 + $0x38] sm:$0xff]
        %v248 = vld [vmem:[%s223] sm:$0xf]
        %v249 = vld [vmem:[%s223 + $0x4] sm:$0xf]
        %v250 = vld [vmem:[%s223 + $0x8] sm:$0xf]
        %v251 = vld [vmem:[%s223 + $0xc] sm:$0xf]
        %v252 = vld [vmem:[%s198] sm:$0xff]
        %v253 = vld [vmem:[%s198 + $0x8] sm:$0xff]
        %v254 = vld [vmem:[%s198 + $0x10] sm:$0xff]
        %v255 = vld [vmem:[%s198 + $0x18] sm:$0xff]
        %v256 = vld [vmem:[%s198 + $0x20] sm:$0x33]
        %v261 = vunpack.c.l.b16 %v248
        %v262 = vunpack.c.l.b16 %v249
        %v263 = vunpack.c.l.b16 %v250
        %v264 = vunpack.c.l.b16 %v251
        %v265 = vpack.c.b16 %v262, %v261
        %v266 = vpack.c.b16 %v264, %v263
        %v272 = vunpack.c.l.b16 %v252
        %v273 = vunpack.c.h.b16 %v252
        %v274 = vunpack.c.l.b16 %v253
        %v275 = vunpack.c.h.b16 %v253
        %v276 = vunpack.c.l.b16 %v254
        %v277 = vunpack.c.h.b16 %v254
        %v278 = vunpack.c.l.b16 %v255
        %v279 = vunpack.c.h.b16 %v255
        %v280 = vunpack.c.l.b16 %v256
        %v281 = vunpack.c.h.b16 %v256
        %v282 = vpack.c.b16 %v274, %v272
        %v283 = vpack.c.b16 %v275, %v273
        %v284 = vpack.c.b16 %v278, %v276
        %v285 = vpack.c.b16 %v279, %v277
        %v286 = vpack.c.b16 %v280, %v280
        %v287 = vpack.c.b16 %v281, %v281
        %vm292 = vcmask 293888
        %v294 = vsel %vm292, %v265, 0
        %v297 = vsel %vm292, %v266, 0
        %vm299 = vcmask 1041408
        %v301 = vsel %vm299, %v286, 0
        %v304 = vsel %vm299, %v287, 0
        %306 = vmatpush.bf16.msra.mxu0 0
        %307 = vmatpush.bf16.msra.mxu0 0
        %308 = vmatpush.bf16.msra.mxu0 0
        %309 = vmatpush.bf16.msra.mxu0 0
        %310 = vmatpush.bf16.msra.mxu0 0
        %311 = vmatpush.bf16.msra.mxu0 %v301
        %312 = vmatpush.bf16.msra.mxu0 %v284
        %313 = vmatpush.bf16.msra.mxu0 %v282
        %314 = vmatmul.bf16.gmra.mxu0 %v294
        %v315 = vpop.f32.mrf.mxu0
        %v316 = vadd.f32 0.0, %v315
        %v317 = vpop.f32.mrf.mxu0
        %v318 = vadd.f32 0.0, %v317
        %319 = vmatmul.bf16.gmra.mxu0 %v297
        %v320 = vpop.f32.mrf.mxu0
        %v321 = vadd.f32 0.0, %v320
        %v322 = vpop.f32.mrf.mxu0
        %v323 = vadd.f32 0.0, %v322
        %324 = vdwg.mxu0
        %325 = vmatpush.bf16.msra.mxu0 0
        %326 = vmatpush.bf16.msra.mxu0 0
        %327 = vmatpush.bf16.msra.mxu0 0
        %328 = vmatpush.bf16.msra.mxu0 0
        %329 = vmatpush.bf16.msra.mxu0 0
        %330 = vmatpush.bf16.msra.mxu0 %v304
        %331 = vmatpush.bf16.msra.mxu0 %v285
        %332 = vmatpush.bf16.msra.mxu0 %v283
        %333 = vmatmul.bf16.gmra.mxu0 %v294
        %v334 = vpop.f32.mrf.mxu0
        %v335 = vadd.f32 0.0, %v334
        %v336 = vpop.f32.mrf.mxu0
        %v337 = vadd.f32 0.0, %v336
        %338 = vmatmul.bf16.gmra.mxu0 %v297
        %v339 = vpop.f32.mrf.mxu0
        %v340 = vadd.f32 0.0, %v339
        %v341 = vpop.f32.mrf.mxu0
        %v342 = vadd.f32 0.0, %v341
        %343 = vdwg.mxu0
        %v344 = vadd.f32 %v240, %v316
        %v345 = vadd.f32 %v241, %v335
        %v346 = vadd.f32 %v242, %v318
        %v347 = vadd.f32 %v243, %v337
        %v348 = vadd.f32 %v244, %v321
        %v349 = vadd.f32 %v245, %v340
        %v350 = vadd.f32 %v246, %v323
        %v351 = vadd.f32 %v247, %v342
        %352 = vst [vmem:[#allocation2] sm:$0xff] %v344
        %353 = vst [vmem:[#allocation2 + $0x8] sm:$0xff] %v345
        %354 = vst [vmem:[#allocation2 + $0x10] sm:$0xff] %v346
        %355 = vst [vmem:[#allocation2 + $0x18] sm:$0xff] %v347
        %356 = vst [vmem:[#allocation2 + $0x20] sm:$0xff] %v348
        %357 = vst [vmem:[#allocation2 + $0x28] sm:$0xff] %v349
        %358 = vst [vmem:[#allocation2 + $0x30] sm:$0xff] %v350
        %359 = vst [vmem:[#allocation2 + $0x38] sm:$0xff] %v351
        // Predicated region
        $region71: #{deconv_forward.2} parent=61 // pred_check
          %p360 = pneg %p228
        $region72: #{deconv_forward.2} parent=61 // pred_check_branch
          %362 = sbr.rel (%p360) target = $region74
        $region73: #{deconv_forward.2} parent=61 // pred_region
          %v363 = vld [vmem:[#allocation2] sm:$0xff]
          %v364 = vld [vmem:[#allocation2 + $0x8] sm:$0xff]
          %v365 = vld [vmem:[#allocation2 + $0x10] sm:$0xff]
          %v366 = vld [vmem:[#allocation2 + $0x18] sm:$0xff]
          %v367 = vld [vmem:[#allocation2 + $0x20] sm:$0xff]
          %v368 = vld [vmem:[#allocation2 + $0x28] sm:$0xff]
          %v369 = vld [vmem:[#allocation2 + $0x30] sm:$0xff]
          %v370 = vld [vmem:[#allocation2 + $0x38] sm:$0xff]
          %v371 = vpack.c.bf16 %v364, %v363
          %v372 = vpack.c.bf16 %v366, %v365
          %v373 = vpack.c.bf16 %v368, %v367
          %v374 = vpack.c.bf16 %v370, %v369
          %375 = vst [vmem:[%s219] sm:$0xff] %v371
          %376 = vst [vmem:[%s219 + $0x8] sm:$0xff] %v372
          %377 = vst [vmem:[%s219 + $0x10] sm:$0xff] %v373
          %378 = vst [vmem:[%s219 + $0x18] sm:$0xff] %v374
        $region74: #{deconv_forward.2} parent=61 // pred_fallthru
          _
        %s379 = sand.u32 %s87, 1
        %s380 = sand.u32 %s87, 1
        %s381 = smul.addr %s380, 32
        %s382 = scalar_lea.vmem [#allocation4], %s381
        // Predicated region
        $region75: #{deconv_forward.2} parent=61 // pred_check
          %p383 = pneg %p97
        $region76: #{deconv_forward.2} parent=61 // pred_check_branch
          %385 = sbr.rel (%p383) target = $region78
        $region77: #{deconv_forward.2} parent=61 // pred_region
          %s386 = smul.u32 2, %s17
          %s387 = smul.addr %s386, 4
          %s388 = scalar_lea.vmem %s2, %s387
          // Predicated region
          $region79: #{deconv_forward.2} parent=77 // pred_check
            _
          $region80: #{deconv_forward.2} parent=77 // pred_check_branch
            %390 = sbr.rel (0) target = $region82
          $region81: #{deconv_forward.2} parent=77 // pred_region
            // Predicated region
            $region83: #{deconv_forward.2} parent=81 // pred_check
              _
            $region84: #{deconv_forward.2} parent=81 // pred_check_branch
              %392 = sbr.rel (0) target = $region86
            $region85: #{deconv_forward.2} parent=81 // pred_region
              // Predicated region
              $region98: #{deconv_forward.2} parent=85 // pred_check
                _
              $region99: #{deconv_forward.2} parent=85 // pred_check_branch
                %414 = sbr.rel (0) target = $region101
              $region100: #{deconv_forward.2} parent=85 // pred_region
                loop: start=0, step=1, limit=1
                $region102: #{deconv_forward.2} parent=100 // loop_pre_header
                  _
                $region103: #{deconv_forward.2} parent=100 // loop_header
                  %s416 = sphi 0, %s420
                  %p417 = scmp.ge.s32.totalorder %s416, 1
                  %s421 = sphi %s382, %s382
                  %s422 = sphi %s388, %s388
                $region104: #{deconv_forward.2} parent=100 // loop_header_branch
                  %419 = sbr.rel (%p417) target = $region108
                $region105: #{deconv_forward.2} parent=100 // loop_body
                  %v423 = vld [vmem:[%s421] sm:$0xff]
                  %424 = vst [vmem:[%s422] sm:$0xff] %v423
                  %v425 = vld [vmem:[%s421 + $0x8] sm:$0xff]
                  %426 = vst [vmem:[%s422 + $0x10] sm:$0xff] %v425
                  %v427 = vld [vmem:[%s421 + $0x10] sm:$0xff]
                  %428 = vst [vmem:[%s422 + $0x20] sm:$0xff] %v427
                  %v429 = vld [vmem:[%s421 + $0x18] sm:$0xff]
                  %430 = vst [vmem:[%s422 + $0x30] sm:$0xff] %v429
                $region106: #{deconv_forward.2} parent=100 // loop_footer
                  %s420 = sadd.s32 1, %s416
                $region107: #{deconv_forward.2} parent=100 // loop_footer_branch
                  %415 = sbr.rel target = $region103
                $region108: #{deconv_forward.2} parent=100 // loop_exit
                  _
              $region101: #{deconv_forward.2} parent=85 // pred_fallthru
                _
              // Predicated region
              $region109: #{deconv_forward.2} parent=85 // pred_check
                _
              $region110: #{deconv_forward.2} parent=85 // pred_check_branch
                %432 = sbr.rel target = $region112
              $region111: #{deconv_forward.2} parent=85 // pred_region
                _
              $region112: #{deconv_forward.2} parent=85 // pred_fallthru
                _
            $region86: #{deconv_forward.2} parent=81 // pred_fallthru
              _
            // Predicated region
            $region87: #{deconv_forward.2} parent=81 // pred_check
              _
            $region88: #{deconv_forward.2} parent=81 // pred_check_branch
              %394 = sbr.rel target = $region90
            $region89: #{deconv_forward.2} parent=81 // pred_region
              %s396 = ssub.s32 256, 1
              loop: start=0, step=1, limit=1
              $region91: #{deconv_forward.2} parent=89 // loop_pre_header
                _
              $region92: #{deconv_forward.2} parent=89 // loop_header
                %s398 = sphi 0, %s402
                %p399 = scmp.ge.s32.totalorder %s398, 1
                %s403 = sphi %s382, %s382
                %s404 = sphi %s388, %s388
              $region93: #{deconv_forward.2} parent=89 // loop_header_branch
                %401 = sbr.rel (%p399) target = $region97
              $region94: #{deconv_forward.2} parent=89 // loop_body
                %v405 = vld [vmem:[%s403] sm:%s396]
                %406 = vst [vmem:[%s404] sm:%s396] %v405
                %v407 = vld [vmem:[%s403 + $0x8] sm:%s396]
                %408 = vst [vmem:[%s404 + $0x10] sm:%s396] %v407
                %v409 = vld [vmem:[%s403 + $0x10] sm:%s396]
                %410 = vst [vmem:[%s404 + $0x20] sm:%s396] %v409
                %v411 = vld [vmem:[%s403 + $0x18] sm:%s396]
                %412 = vst [vmem:[%s404 + $0x30] sm:%s396] %v411
              $region95: #{deconv_forward.2} parent=89 // loop_footer
                %s402 = sadd.s32 1, %s398
              $region96: #{deconv_forward.2} parent=89 // loop_footer_branch
                %397 = sbr.rel target = $region92
              $region97: #{deconv_forward.2} parent=89 // loop_exit
                _
            $region90: #{deconv_forward.2} parent=81 // pred_fallthru
              _
          $region82: #{deconv_forward.2} parent=77 // pred_fallthru
            _
          %433 = vnop
        $region78: #{deconv_forward.2} parent=61 // pred_fallthru
          _
      $region62: #{deconv_forward.2} parent=5 // pred_fallthru
        _
      %p434 = scmp.le.s32.totalorder 2, %s8
      // Predicated region
      $region113: #{deconv_forward.2} parent=5 // pred_check
        %p435 = pneg %p434
      $region114: #{deconv_forward.2} parent=5 // pred_check_branch
        %437 = sbr.rel (%p435) target = $region116
      $region115: #{deconv_forward.2} parent=5 // pred_region
        %s438 = ssub.s32 %s8, 2
        // Predicated region
        $region117: #{deconv_forward.2} parent=115 // pred_check
          %p439 = pneg %p103
        $region118: #{deconv_forward.2} parent=115 // pred_check_branch
          %441 = sbr.rel (%p439) target = $region120
        $region119: #{deconv_forward.2} parent=115 // pred_region
          %s442 = sand.u32 %s88, 1
          %s443 = sand.u32 %s88, 1
          %s444 = smul.addr %s443, 32
          %s445 = scalar_lea.vmem [#allocation4], %s444
        $region120: #{deconv_forward.2} parent=115 // pred_fallthru
          _
      $region116: #{deconv_forward.2} parent=5 // pred_fallthru
        _
    $region6: #{deconv_forward.2} parent=1 // loop_footer
      %s12 = sadd.s32 1, %s8
    $region7: #{deconv_forward.2} parent=1 // loop_footer_branch
      %7 = sbr.rel target = $region3
    $region8: #{deconv_forward.2} parent=1 // loop_exit
      _

// kernel: deconv_forward.3
$region0: #{deconv_forward.3}
  #allocation0 [shape = 'u32[]', space=smem, size = 0x4, offset = 0x4, fixed_abs, tag = 'smem constant byte address 0x4 - core index']
  #allocation1 [shape = 'u32[72,128]{1,0:T(1,128)}', space=vmem, size = 0x9000, scoped, tag = 'internal scratch']
  #allocation2 [shape = 'f32[8,1024]{1,0:T(8,128)}', space=vmem, size = 0x8000, scoped, tag = 'scratch operand']
  %s0 = inlined_call_operand.vmem [shape: bf16[8,128], index: 0, kind: input, shape index: {}]
  %s1 = inlined_call_operand.vmem [shape: bf16[128,2048], index: 1, kind: input, shape index: {}]
  %s2 = inlined_call_operand.vmem [shape: f32[8,2048], index: 2, kind: output, shape index: {}]
  %s3 = sld [smem:[#allocation0]]
  $region72: #{deconv_forward.3} parent=0
    _
  %s5 = ssub.s32 1, %s3
  %s6 = scalar_select 0, %s5, %s3
  $region1: #{deconv_forward.3} parent=0
    #allocation3 [shape = 'u8[524288]{0}', space=vmem, size = 0x80000, scoped, tag = 'input window, operand 1']
    loop: start=0, step=1, limit=4
    $region2: #{deconv_forward.3} parent=1 // loop_pre_header
      _
    $region3: #{deconv_forward.3} parent=1 // loop_header
      %s8 = sphi 0, %s12
      %p9 = scmp.ge.s32.totalorder %s8, 4
      %s15 = sphi 0, %s27
      %s16 = sphi 0, %s23
      %s17 = sphi 0, %s15
      %s18 = sphi 0, %s16
      %s19 = sphi 0, %s17
      %s20 = sphi 0, %s18
      %s30 = sphi 0, %s32
      %s33 = sphi 0, %s30
      %s34 = sphi 0, %s33
      %s50 = sphi 0, %s34
      %s58 = sphi 0, %s60
      %s61 = sphi 0, %s58
      %s62 = sphi 0, %s61
      %s78 = sphi 0, %s62
      %s84 = sphi 0, %s86
      %s87 = sphi 0, %s84
      %s88 = sphi 0, %s87
      %s104 = sphi 0, %s88
    $region4: #{deconv_forward.3} parent=1 // loop_header_branch
      %11 = sbr.rel (%p9) target = $region8
    $region5: #{deconv_forward.3} parent=1 // loop_body
      %s13 = ssub.s32 %s8, 1
      %s14 = ssub.s32 %s8, 2
      %s21 = sadd.s32 1, %s16
      %p22 = scmp.ge.s32.totalorder %s21, 1
      %s23 = scalar_select %p22, 0, %s21
      %s24 = sadd.s32 1, %s15
      %s25 = scalar_select %p22, %s24, %s15
      %p26 = scmp.ge.s32.totalorder %s25, 2
      %s27 = scalar_select %p26, 0, %s25
      %s28 = ssub.s32 %s16, %s23
      %p29 = scmp.eq.s32.totalorder %s28, 0
      %s31 = sadd.s32 %s30, 1
      %s32 = scalar_select %p29, %s30, %s31
      %p35 = pneg %p29
      %p36 = scmp.eq.s32.totalorder %s8, 1
      %p37 = por %p35, %p36
      %p38 = scmp.ne.s32.totalorder %s30, %s33
      %p39 = scmp.eq.s32.totalorder %s8, 0
      %p40 = por %p38, %p39
      %p41 = scmp.ne.s32.totalorder %s30, %s33
      %p42 = scmp.eq.s32.totalorder %s13, 1
      %p43 = por %p41, %p42
      %p44 = scmp.ne.s32.totalorder %s33, %s34
      %p45 = scmp.eq.s32.totalorder %s13, 0
      %p46 = por %p44, %p45
      %p47 = scmp.ne.s32.totalorder %s33, %s34
      %p48 = scmp.eq.s32.totalorder %s14, 1
      %p49 = por %p47, %p48
      %p51 = scmp.ne.s32.totalorder %s34, %s50
      %p52 = scmp.eq.s32.totalorder %s14, 0
      %p53 = por %p51, %p52
      %s54 = ssub.s32 %s16, %s23
      %s55 = ssub.s32 %s15, %s27
      %s56 = sor.u32 %s54, %s55
      %p57 = scmp.eq.s32.totalorder %s56, 0
      %s59 = sadd.s32 %s58, 1
      %s60 = scalar_select %p57, %s58, %s59
      %p63 = pneg %p57
      %p64 = scmp.eq.s32.totalorder %s8, 1
      %p65 = por %p63, %p64
      %p66 = scmp.ne.s32.totalorder %s58, %s61
      %p67 = scmp.eq.s32.totalorder %s8, 0
      %p68 = por %p66, %p67
      %p69 = scmp.ne.s32.totalorder %s58, %s61
      %p70 = scmp.eq.s32.totalorder %s13, 1
      %p71 = por %p69, %p70
      %p72 = scmp.ne.s32.totalorder %s61, %s62
      %p73 = scmp.eq.s32.totalorder %s13, 0
      %p74 = por %p72, %p73
      %p75 = scmp.ne.s32.totalorder %s61, %s62
      %p76 = scmp.eq.s32.totalorder %s14, 1
      %p77 = por %p75, %p76
      %p79 = scmp.ne.s32.totalorder %s62, %s78
      %p80 = scmp.eq.s32.totalorder %s14, 0
      %p81 = por %p79, %p80
      %s82 = ssub.s32 %s15, %s27
      %p83 = scmp.eq.s32.totalorder %s82, 0
      %s85 = sadd.s32 %s84, 1
      %s86 = scalar_select %p83, %s84, %s85
      %p89 = pneg %p83
      %p90 = scmp.eq.s32.totalorder %s8, 1
      %p91 = por %p89, %p90
      %p92 = scmp.ne.s32.totalorder %s84, %s87
      %p93 = scmp.eq.s32.totalorder %s8, 0
      %p94 = por %p92, %p93
      %p95 = scmp.ne.s32.totalorder %s84, %s87
      %p96 = scmp.eq.s32.totalorder %s13, 1
      %p97 = por %p95, %p96
      %p98 = scmp.ne.s32.totalorder %s87, %s88
      %p99 = scmp.eq.s32.totalorder %s13, 0
      %p100 = por %p98, %p99
      %p101 = scmp.ne.s32.totalorder %s87, %s88
      %p102 = scmp.eq.s32.totalorder %s14, 1
      %p103 = por %p101, %p102
      %p105 = scmp.ne.s32.totalorder %s88, %s104
      %p106 = scmp.eq.s32.totalorder %s14, 0
      %p107 = por %p105, %p106
      %p108 = scmp.le.s32.totalorder 1, %s8
      %p109 = scmp.lt.s32.totalorder %s8, 3
      %p110 = pnand %p108, %p109
      %p111 = pneg %p110
      // Predicated region
      $region9: #{deconv_forward.3} parent=5 // pred_check
        _
      $region10: #{deconv_forward.3} parent=5 // pred_check_branch
        %113 = sbr.rel (%p110) target = $region12
      $region11: #{deconv_forward.3} parent=5 // pred_region
        %s114 = ssub.s32 %s8, 1
        // Predicated region
        $region13: #{deconv_forward.3} parent=11 // pred_check
          %p115 = pneg %p46
        $region14: #{deconv_forward.3} parent=11 // pred_check_branch
          %117 = sbr.rel (%p115) target = $region16
        $region15: #{deconv_forward.3} parent=11 // pred_region
          %p118 = scmp.lt.s32.totalorder %s18, 0
          %s119 = scalar_select %p118, %s18, 0
          %s120 = smul.addr %s119, 4
          %s121 = scalar_lea.vmem %s0, %s120
        $region16: #{deconv_forward.3} parent=11 // pred_fallthru
          _
      $region12: #{deconv_forward.3} parent=5 // pred_fallthru
        _
      %p122 = scmp.lt.s32.totalorder %s8, 2
      // Predicated region
      $region17: #{deconv_forward.3} parent=5 // pred_check
        %p123 = pneg %p122
      $region18: #{deconv_forward.3} parent=5 // pred_check_branch
        %125 = sbr.rel (%p123) target = $region20
      $region19: #{deconv_forward.3} parent=5 // pred_region
        // Predicated region
        $region21: #{deconv_forward.3} parent=19 // pred_check
          %p126 = pneg %p68
        $region22: #{deconv_forward.3} parent=19 // pred_check_branch
          %128 = sbr.rel (%p126) target = $region24
        $region23: #{deconv_forward.3} parent=19 // pred_region
          %s129 = sand.u32 %s58, 1
          %s130 = sand.u32 %s58, 1
          %s131 = smul.addr %s130, 512
          %s132 = scalar_lea.vmem [#allocation3], %s131
          %s133 = smul.u32 16, %s16
          %s134 = smul.u32 8, %s15
          %s135 = smul.addr %s133, 16
          %s136 = sadd.s32 %s134, %s135
          %s137 = smul.addr %s136, 4
          %s138 = scalar_lea.vmem %s1, %s137
          // Predicated region
          $region25: #{deconv_forward.3} parent=23 // pred_check
            _
          $region26: #{deconv_forward.3} parent=23 // pred_check_branch
            %140 = sbr.rel (0) target = $region28
          $region27: #{deconv_forward.3} parent=23 // pred_region
            // Predicated region
            $region29: #{deconv_forward.3} parent=27 // pred_check
              _
            $region30: #{deconv_forward.3} parent=27 // pred_check_branch
              %142 = sbr.rel (0) target = $region32
            $region31: #{deconv_forward.3} parent=27 // pred_region
              loop: start=0, step=1, limit=1
              $region33: #{deconv_forward.3} parent=31 // loop_pre_header
                _
              $region34: #{deconv_forward.3} parent=31 // loop_header
                %s144 = sphi 0, %s148
                %p145 = scmp.ge.s32.totalorder %s144, 1
                %s149 = sphi %s138, %s138
                %s150 = sphi %s132, %s132
              $region35: #{deconv_forward.3} parent=31 // loop_header_branch
                %147 = sbr.rel (%p145) target = $region39
              $region36: #{deconv_forward.3} parent=31 // loop_body
                %v151 = vld [vmem:[%s149] sm:$0xff]
                %152 = vst [vmem:[%s150] sm:$0xff] %v151
                %v153 = vld [vmem:[%s149 + $0x8] sm:$0xff]
                %154 = vst [vmem:[%s150 + $0x8] sm:$0xff] %v153
                %v155 = vld [vmem:[%s149 + $0x10] sm:$0xff]
                %156 = vst [vmem:[%s150 + $0x10] sm:$0xff] %v155
                %v157 = vld [vmem:[%s149 + $0x18] sm:$0xff]
                %158 = vst [vmem:[%s150 + $0x18] sm:$0xff] %v157
                %v159 = vld [vmem:[%s149 + $0x40] sm:$0xff]
                %160 = vst [vmem:[%s150 + $0x20] sm:$0xff] %v159
                %v161 = vld [vmem:[%s149 + $0x48] sm:$0xff]
                %162 = vst [vmem:[%s150 + $0x28] sm:$0xff] %v161
                %v163 = vld [vmem:[%s149 + $0x50] sm:$0xff]
                %164 = vst [vmem:[%s150 + $0x30] sm:$0xff] %v163
                %v165 = vld [vmem:[%s149 + $0x58] sm:$0xff]
                %166 = vst [vmem:[%s150 + $0x38] sm:$0xff] %v165
                %v167 = vld [vmem:[%s149 + $0x80] sm:$0xff]
                %168 = vst [vmem:[%s150 + $0x40] sm:$0xff] %v167
                %v169 = vld [vmem:[%s149 + $0x88] sm:$0xff]
                %170 = vst [vmem:[%s150 + $0x48] sm:$0xff] %v169
                %v171 = vld [vmem:[%s149 + $0x90] sm:$0xff]
                %172 = vst [vmem:[%s150 + $0x50] sm:$0xff] %v171
                %v173 = vld [vmem:[%s149 + $0x98] sm:$0xff]
                %174 = vst [vmem:[%s150 + $0x58] sm:$0xff] %v173
                %v175 = vld [vmem:[%s149 + $0xc0] sm:$0xff]
                %176 = vst [vmem:[%s150 + $0x60] sm:$0xff] %v175
                %v177 = vld [vmem:[%s149 + $0xc8] sm:$0xff]
                %178 = vst [vmem:[%s150 + $0x68] sm:$0xff] %v177
                %v179 = vld [vmem:[%s149 + $0xd0] sm:$0xff]
                %180 = vst [vmem:[%s150 + $0x70] sm:$0xff] %v179
                %v181 = vld [vmem:[%s149 + $0xd8] sm:$0xff]
                %182 = vst [vmem:[%s150 + $0x78] sm:$0xff] %v181
                %v183 = vld [vmem:[%s149 + $0x100] sm:$0xff]
                %184 = vst [vmem:[%s150 + $0x80] sm:$0xff] %v183
                %v185 = vld [vmem:[%s149 + $0x108] sm:$0xff]
                %186 = vst [vmem:[%s150 + $0x88] sm:$0xff] %v185
                %v187 = vld [vmem:[%s149 + $0x110] sm:$0xff]
                %188 = vst [vmem:[%s150 + $0x90] sm:$0xff] %v187
                %v189 = vld [vmem:[%s149 + $0x118] sm:$0xff]
                %190 = vst [vmem:[%s150 + $0x98] sm:$0xff] %v189
                %v191 = vld [vmem:[%s149 + $0x140] sm:$0xff]
                %192 = vst [vmem:[%s150 + $0xa0] sm:$0xff] %v191
                %v193 = vld [vmem:[%s149 + $0x148] sm:$0xff]
                %194 = vst [vmem:[%s150 + $0xa8] sm:$0xff] %v193
                %v195 = vld [vmem:[%s149 + $0x150] sm:$0xff]
                %196 = vst [vmem:[%s150 + $0xb0] sm:$0xff] %v195
                %v197 = vld [vmem:[%s149 + $0x158] sm:$0xff]
                %198 = vst [vmem:[%s150 + $0xb8] sm:$0xff] %v197
                %v199 = vld [vmem:[%s149 + $0x180] sm:$0xff]
                %200 = vst [vmem:[%s150 + $0xc0] sm:$0xff] %v199
                %v201 = vld [vmem:[%s149 + $0x188] sm:$0xff]
                %202 = vst [vmem:[%s150 + $0xc8] sm:$0xff] %v201
                %v203 = vld [vmem:[%s149 + $0x190] sm:$0xff]
                %204 = vst [vmem:[%s150 + $0xd0] sm:$0xff] %v203
                %v205 = vld [vmem:[%s149 + $0x198] sm:$0xff]
                %206 = vst [vmem:[%s150 + $0xd8] sm:$0xff] %v205
                %v207 = vld [vmem:[%s149 + $0x1c0] sm:$0xff]
                %208 = vst [vmem:[%s150 + $0xe0] sm:$0xff] %v207
                %v209 = vld [vmem:[%s149 + $0x1c8] sm:$0xff]
                %210 = vst [vmem:[%s150 + $0xe8] sm:$0xff] %v209
                %v211 = vld [vmem:[%s149 + $0x1d0] sm:$0xff]
                %212 = vst [vmem:[%s150 + $0xf0] sm:$0xff] %v211
                %v213 = vld [vmem:[%s149 + $0x1d8] sm:$0xff]
                %214 = vst [vmem:[%s150 + $0xf8] sm:$0xff] %v213
                %v215 = vld [vmem:[%s149 + $0x200] sm:$0xff]
                %216 = vst [vmem:[%s150 + $0x100] sm:$0xff] %v215
                %v217 = vld [vmem:[%s149 + $0x208] sm:$0xff]
                %218 = vst [vmem:[%s150 + $0x108] sm:$0xff] %v217
                %v219 = vld [vmem:[%s149 + $0x210] sm:$0xff]
                %220 = vst [vmem:[%s150 + $0x110] sm:$0xff] %v219
                %v221 = vld [vmem:[%s149 + $0x218] sm:$0xff]
                %222 = vst [vmem:[%s150 + $0x118] sm:$0xff] %v221
                %v223 = vld [vmem:[%s149 + $0x240] sm:$0xff]
                %224 = vst [vmem:[%s150 + $0x120] sm:$0xff] %v223
                %v225 = vld [vmem:[%s149 + $0x248] sm:$0xff]
                %226 = vst [vmem:[%s150 + $0x128] sm:$0xff] %v225
                %v227 = vld [vmem:[%s149 + $0x250] sm:$0xff]
                %228 = vst [vmem:[%s150 + $0x130] sm:$0xff] %v227
                %v229 = vld [vmem:[%s149 + $0x258] sm:$0xff]
                %230 = vst [vmem:[%s150 + $0x138] sm:$0xff] %v229
                %v231 = vld [vmem:[%s149 + $0x280] sm:$0xff]
                %232 = vst [vmem:[%s150 + $0x140] sm:$0xff] %v231
                %v233 = vld [vmem:[%s149 + $0x288] sm:$0xff]
                %234 = vst [vmem:[%s150 + $0x148] sm:$0xff] %v233
                %v235 = vld [vmem:[%s149 + $0x290] sm:$0xff]
                %236 = vst [vmem:[%s150 + $0x150] sm:$0xff] %v235
                %v237 = vld [vmem:[%s149 + $0x298] sm:$0xff]
                %238 = vst [vmem:[%s150 + $0x158] sm:$0xff] %v237
                %v239 = vld [vmem:[%s149 + $0x2c0] sm:$0xff]
                %240 = vst [vmem:[%s150 + $0x160] sm:$0xff] %v239
                %v241 = vld [vmem:[%s149 + $0x2c8] sm:$0xff]
                %242 = vst [vmem:[%s150 + $0x168] sm:$0xff] %v241
                %v243 = vld [vmem:[%s149 + $0x2d0] sm:$0xff]
                %244 = vst [vmem:[%s150 + $0x170] sm:$0xff] %v243
                %v245 = vld [vmem:[%s149 + $0x2d8] sm:$0xff]
                %246 = vst [vmem:[%s150 + $0x178] sm:$0xff] %v245
                %v247 = vld [vmem:[%s149 + $0x300] sm:$0xff]
                %248 = vst [vmem:[%s150 + $0x180] sm:$0xff] %v247
                %v249 = vld [vmem:[%s149 + $0x308] sm:$0xff]
                %250 = vst [vmem:[%s150 + $0x188] sm:$0xff] %v249
                %v251 = vld [vmem:[%s149 + $0x310] sm:$0xff]
                %252 = vst [vmem:[%s150 + $0x190] sm:$0xff] %v251
                %v253 = vld [vmem:[%s149 + $0x318] sm:$0xff]
                %254 = vst [vmem:[%s150 + $0x198] sm:$0xff] %v253
                %v255 = vld [vmem:[%s149 + $0x340] sm:$0xff]
                %256 = vst [vmem:[%s150 + $0x1a0] sm:$0xff] %v255
                %v257 = vld [vmem:[%s149 + $0x348] sm:$0xff]
                %258 = vst [vmem:[%s150 + $0x1a8] sm:$0xff] %v257
                %v259 = vld [vmem:[%s149 + $0x350] sm:$0xff]
                %260 = vst [vmem:[%s150 + $0x1b0] sm:$0xff] %v259
                %v261 = vld [vmem:[%s149 + $0x358] sm:$0xff]
                %262 = vst [vmem:[%s150 + $0x1b8] sm:$0xff] %v261
                %v263 = vld [vmem:[%s149 + $0x380] sm:$0xff]
                %264 = vst [vmem:[%s150 + $0x1c0] sm:$0xff] %v263
                %v265 = vld [vmem:[%s149 + $0x388] sm:$0xff]
                %266 = vst [vmem:[%s150 + $0x1c8] sm:$0xff] %v265
                %v267 = vld [vmem:[%s149 + $0x390] sm:$0xff]
                %268 = vst [vmem:[%s150 + $0x1d0] sm:$0xff] %v267
                %v269 = vld [vmem:[%s149 + $0x398] sm:$0xff]
                %270 = vst [vmem:[%s150 + $0x1d8] sm:$0xff] %v269
                %v271 = vld [vmem:[%s149 + $0x3c0] sm:$0xff]
                %272 = vst [vmem:[%s150 + $0x1e0] sm:$0xff] %v271
                %v273 = vld [vmem:[%s149 + $0x3c8] sm:$0xff]
                %274 = vst [vmem:[%s150 + $0x1e8] sm:$0xff] %v273
                %v275 = vld [vmem:[%s149 + $0x3d0] sm:$0xff]
                %276 = vst [vmem:[%s150 + $0x1f0] sm:$0xff] %v275
                %v277 = vld [vmem:[%s149 + $0x3d8] sm:$0xff]
                %278 = vst [vmem:[%s150 + $0x1f8] sm:$0xff] %v277
              $region37: #{deconv_forward.3} parent=31 // loop_footer
                %s148 = sadd.s32 1, %s144
              $region38: #{deconv_forward.3} parent=31 // loop_footer_branch
                %143 = sbr.rel target = $region34
              $region39: #{deconv_forward.3} parent=31 // loop_exit
                _
            $region32: #{deconv_forward.3} parent=27 // pred_fallthru
              _
            // Predicated region
            $region40: #{deconv_forward.3} parent=27 // pred_check
              _
            $region41: #{deconv_forward.3} parent=27 // pred_check_branch
              %280 = sbr.rel target = $region43
            $region42: #{deconv_forward.3} parent=27 // pred_region
              _
            $region43: #{deconv_forward.3} parent=27 // pred_fallthru
              _
          $region28: #{deconv_forward.3} parent=23 // pred_fallthru
            _
          %281 = vnop
        $region24: #{deconv_forward.3} parent=19 // pred_fallthru
          _
      $region20: #{deconv_forward.3} parent=5 // pred_fallthru
        _
      %p282 = scmp.le.s32.totalorder 1, %s8
      %p283 = scmp.lt.s32.totalorder %s8, 3
      %p284 = pnand %p282, %p283
      %p285 = pneg %p284
      // Predicated region
      $region44: #{deconv_forward.3} parent=5 // pred_check
        _
      $region45: #{deconv_forward.3} parent=5 // pred_check_branch
        %287 = sbr.rel (%p284) target = $region47
      $region46: #{deconv_forward.3} parent=5 // pred_region
        %s288 = ssub.s32 %s8, 1
        %s289 = sand.u32 %s61, 1
        %s290 = sand.u32 %s61, 1
        %s291 = smul.addr %s290, 512
        %s292 = scalar_lea.vmem [#allocation3], %s291
        // Predicated region
        $region48: #{deconv_forward.3} parent=46 // pred_check
          %p293 = pneg %p74
        $region49: #{deconv_forward.3} parent=46 // pred_check_branch
          %295 = sbr.rel (%p293) target = $region51
        $region50: #{deconv_forward.3} parent=46 // pred_region
          _
        $region51: #{deconv_forward.3} parent=46 // pred_fallthru
          _
        %p296 = scmp.lt.s32.totalorder %s18, 0
        %s297 = scalar_select %p296, %s18, 0
        %s298 = smul.addr %s297, 4
        %s299 = scalar_lea.vmem %s0, %s298
        %p300 = pneg %p46
        %p301 = pneg %p43
        %s302 = sand.u32 %s61, 1
        %s303 = sand.u32 %s61, 1
        %s304 = smul.addr %s303, 512
        %s305 = scalar_lea.vmem [#allocation3], %s304
        %p306 = pneg %p74
        %p307 = pneg %p71
        %p308 = pneg %p100
        %p309 = pneg %p97
        %s310 = smul.u32 8, %s17
        %p311 = scmp.lt.s32.totalorder %s310, 15
        %s312 = scalar_select %p311, %s310, 15
        %s313 = smul.addr %s312, 8
        %s314 = scalar_lea.vmem %s2, %s313
        %p315 = scmp.lt.s32.totalorder %s18, 0
        %s316 = scalar_select %p315, %s18, 0
        %s317 = smul.addr %s316, 4
        %s318 = scalar_lea.vmem %s0, %s317
        %s319 = smul.u32 16, %s18
        %s320 = smul.u32 8, %s17
        %s321 = smul.u32 8, %s17
        %p322 = scmp.lt.s32.totalorder %s321, 15
        %s323 = scalar_select %p322, %s321, 15
        %s324 = smul.addr %s323, 8
        %s325 = scalar_lea.vmem %s2, %s324
        %s326 = smul.u32 8, %s17
        %p327 = scmp.eq.s32.totalorder %s18, 0
        // Predicated region
        $region52: #{deconv_forward.3} parent=46 // pred_check
          %p328 = pneg %p327
        $region53: #{deconv_forward.3} parent=46 // pred_check_branch
          %330 = sbr.rel (%p328) target = $region55
        $region54: #{deconv_forward.3} parent=46 // pred_region
          %331 = vst [vmem:[#allocation2] sm:$0xff] 0.0
          %332 = vst [vmem:[#allocation2 + $0x8] sm:$0xff] 0.0
          %333 = vst [vmem:[#allocation2 + $0x10] sm:$0xff] 0.0
          %334 = vst [vmem:[#allocation2 + $0x18] sm:$0xff] 0.0
          %335 = vst [vmem:[#allocation2 + $0x20] sm:$0xff] 0.0
          %336 = vst [vmem:[#allocation2 + $0x28] sm:$0xff] 0.0
          %337 = vst [vmem:[#allocation2 + $0x30] sm:$0xff] 0.0
          %338 = vst [vmem:[#allocation2 + $0x38] sm:$0xff] 0.0
        $region55: #{deconv_forward.3} parent=46 // pred_fallthru
          _
        %v339 = vld [vmem:[#allocation2] sm:$0xff]
        %v340 = vld [vmem:[#allocation2 + $0x8] sm:$0xff]
        %v341 = vld [vmem:[#allocation2 + $0x10] sm:$0xff]
        %v342 = vld [vmem:[#allocation2 + $0x18] sm:$0xff]
        %v343 = vld [vmem:[#allocation2 + $0x20] sm:$0xff]
        %v344 = vld [vmem:[#allocation2 + $0x28] sm:$0xff]
        %v345 = vld [vmem:[#allocation2 + $0x30] sm:$0xff]
        %v346 = vld [vmem:[#allocation2 + $0x38] sm:$0xff]
        %v347 = vld [vmem:[%s318] sm:$0xf]
        %v348 = vld [vmem:[%s292] sm:$0xff]
        %v349 = vld [vmem:[%s292 + $0x8] sm:$0xff]
        %v350 = vld [vmem:[%s292 + $0x10] sm:$0xff]
        %v351 = vld [vmem:[%s292 + $0x18] sm:$0xff]
        %v352 = vld [vmem:[%s292 + $0x20] sm:$0xff]
        %v353 = vld [vmem:[%s292 + $0x28] sm:$0xff]
        %v354 = vld [vmem:[%s292 + $0x30] sm:$0xff]
        %v355 = vld [vmem:[%s292 + $0x38] sm:$0xff]
        %v356 = vld [vmem:[%s292 + $0x40] sm:$0xff]
        %v357 = vld [vmem:[%s292 + $0x48] sm:$0xff]
        %v358 = vld [vmem:[%s292 + $0x50] sm:$0xff]
        %v359 = vld [vmem:[%s292 + $0x58] sm:$0xff]
        %v360 = vld [vmem:[%s292 + $0x60] sm:$0xff]
        %v361 = vld [vmem:[%s292 + $0x68] sm:$0xff]
        %v362 = vld [vmem:[%s292 + $0x70] sm:$0xff]
        %v363 = vld [vmem:[%s292 + $0x78] sm:$0xff]
        %v364 = vld [vmem:[%s292 + $0x80] sm:$0xff]
        %v365 = vld [vmem:[%s292 + $0x88] sm:$0xff]
        %v366 = vld [vmem:[%s292 + $0x90] sm:$0xff]
        %v367 = vld [vmem:[%s292 + $0x98] sm:$0xff]
        %v368 = vld [vmem:[%s292 + $0xa0] sm:$0xff]
        %v369 = vld [vmem:[%s292 + $0xa8] sm:$0xff]
        %v370 = vld [vmem:[%s292 + $0xb0] sm:$0xff]
        %v371 = vld [vmem:[%s292 + $0xb8] sm:$0xff]
        %v372 = vld [vmem:[%s292 + $0xc0] sm:$0xff]
        %v373 = vld [vmem:[%s292 + $0xc8] sm:$0xff]
        %v374 = vld [vmem:[%s292 + $0xd0] sm:$0xff]
        %v375 = vld [vmem:[%s292 + $0xd8] sm:$0xff]
        %v376 = vld [vmem:[%s292 + $0xe0] sm:$0xff]
        %v377 = vld [vmem:[%s292 + $0xe8] sm:$0xff]
        %v378 = vld [vmem:[%s292 + $0xf0] sm:$0xff]
        %v379 = vld [vmem:[%s292 + $0xf8] sm:$0xff]
        %v380 = vld [vmem:[%s292 + $0x100] sm:$0xff]
        %v381 = vld [vmem:[%s292 + $0x108] sm:$0xff]
        %v382 = vld [vmem:[%s292 + $0x110] sm:$0xff]
        %v383 = vld [vmem:[%s292 + $0x118] sm:$0xff]
        %v384 = vld [vmem:[%s292 + $0x120] sm:$0xff]
        %v385 = vld [vmem:[%s292 + $0x128] sm:$0xff]
        %v386 = vld [vmem:[%s292 + $0x130] sm:$0xff]
        %v387 = vld [vmem:[%s292 + $0x138] sm:$0xff]
        %v388 = vld [vmem:[%s292 + $0x140] sm:$0xff]
        %v389 = vld [vmem:[%s292 + $0x148] sm:$0xff]
        %v390 = vld [vmem:[%s292 + $0x150] sm:$0xff]
        %v391 = vld [vmem:[%s292 + $0x158] sm:$0xff]
        %v392 = vld [vmem:[%s292 + $0x160] sm:$0xff]
        %v393 = vld [vmem:[%s292 + $0x168] sm:$0xff]
        %v394 = vld [vmem:[%s292 + $0x170] sm:$0xff]
        %v395 = vld [vmem:[%s292 + $0x178] sm:$0xff]
        %v396 = vld [vmem:[%s292 + $0x180] sm:$0xff]
        %v397 = vld [vmem:[%s292 + $0x188] sm:$0xff]
        %v398 = vld [vmem:[%s292 + $0x190] sm:$0xff]
        %v399 = vld [vmem:[%s292 + $0x198] sm:$0xff]
        %v400 = vld [vmem:[%s292 + $0x1a0] sm:$0xff]
        %v401 = vld [vmem:[%s292 + $0x1a8] sm:$0xff]
        %v402 = vld [vmem:[%s292 + $0x1b0] sm:$0xff]
        %v403 = vld [vmem:[%s292 + $0x1b8] sm:$0xff]
        %v404 = vld [vmem:[%s292 + $0x1c0] sm:$0xff]
        %v405 = vld [vmem:[%s292 + $0x1c8] sm:$0xff]
        %v406 = vld [vmem:[%s292 + $0x1d0] sm:$0xff]
        %v407 = vld [vmem:[%s292 + $0x1d8] sm:$0xff]
        %v408 = vld [vmem:[%s292 + $0x1e0] sm:$0xff]
        %v409 = vld [vmem:[%s292 + $0x1e8] sm:$0xff]
        %v410 = vld [vmem:[%s292 + $0x1f0] sm:$0xff]
        %v411 = vld [vmem:[%s292 + $0x1f8] sm:$0xff]
        %v476 = vunpack.c.l.b16 %v348
        %v477 = vunpack.c.h.b16 %v348
        %v478 = vunpack.c.l.b16 %v349
        %v479 = vunpack.c.h.b16 %v349
        %v480 = vunpack.c.l.b16 %v350
        %v481 = vunpack.c.h.b16 %v350
        %v482 = vunpack.c.l.b16 %v351
        %v483 = vunpack.c.h.b16 %v351
        %v484 = vunpack.c.l.b16 %v352
        %v485 = vunpack.c.h.b16 %v352
        %v486 = vunpack.c.l.b16 %v353
        %v487 = vunpack.c.h.b16 %v353
        %v488 = vunpack.c.l.b16 %v354
        %v489 = vunpack.c.h.b16 %v354
        %v490 = vunpack.c.l.b16 %v355
        %v491 = vunpack.c.h.b16 %v355
        %v492 = vunpack.c.l.b16 %v356
        %v493 = vunpack.c.h.b16 %v356
        %v494 = vunpack.c.l.b16 %v357
        %v495 = vunpack.c.h.b16 %v357
        %v496 = vunpack.c.l.b16 %v358
        %v497 = vunpack.c.h.b16 %v358
        %v498 = vunpack.c.l.b16 %v359
        %v499 = vunpack.c.h.b16 %v359
        %v500 = vunpack.c.l.b16 %v360
        %v501 = vunpack.c.h.b16 %v360
        %v502 = vunpack.c.l.b16 %v361
        %v503 = vunpack.c.h.b16 %v361
        %v504 = vunpack.c.l.b16 %v362
        %v505 = vunpack.c.h.b16 %v362
        %v506 = vunpack.c.l.b16 %v363
        %v507 = vunpack.c.h.b16 %v363
        %v508 = vunpack.c.l.b16 %v364
        %v509 = vunpack.c.h.b16 %v364
        %v510 = vunpack.c.l.b16 %v365
        %v511 = vunpack.c.h.b16 %v365
        %v512 = vunpack.c.l.b16 %v366
        %v513 = vunpack.c.h.b16 %v366
        %v514 = vunpack.c.l.b16 %v367
        %v515 = vunpack.c.h.b16 %v367
        %v516 = vunpack.c.l.b16 %v368
        %v517 = vunpack.c.h.b16 %v368
        %v518 = vunpack.c.l.b16 %v369
        %v519 = vunpack.c.h.b16 %v369
        %v520 = vunpack.c.l.b16 %v370
        %v521 = vunpack.c.h.b16 %v370
        %v522 = vunpack.c.l.b16 %v371
        %v523 = vunpack.c.h.b16 %v371
        %v524 = vunpack.c.l.b16 %v372
        %v525 = vunpack.c.h.b16 %v372
        %v526 = vunpack.c.l.b16 %v373
        %v527 = vunpack.c.h.b16 %v373
        %v528 = vunpack.c.l.b16 %v374
        %v529 = vunpack.c.h.b16 %v374
        %v530 = vunpack.c.l.b16 %v375
        %v531 = vunpack.c.h.b16 %v375
        %v532 = vunpack.c.l.b16 %v376
        %v533 = vunpack.c.h.b16 %v376
        %v534 = vunpack.c.l.b16 %v377
        %v535 = vunpack.c.h.b16 %v377
        %v536 = vunpack.c.l.b16 %v378
        %v537 = vunpack.c.h.b16 %v378
        %v538 = vunpack.c.l.b16 %v379
        %v539 = vunpack.c.h.b16 %v379
        %v540 = vunpack.c.l.b16 %v380
        %v541 = vunpack.c.h.b16 %v380
        %v542 = vunpack.c.l.b16 %v381
        %v543 = vunpack.c.h.b16 %v381
        %v544 = vunpack.c.l.b16 %v382
        %v545 = vunpack.c.h.b16 %v382
        %v546 = vunpack.c.l.b16 %v383
        %v547 = vunpack.c.h.b16 %v383
        %v548 = vunpack.c.l.b16 %v384
        %v549 = vunpack.c.h.b16 %v384
        %v550 = vunpack.c.l.b16 %v385
        %v551 = vunpack.c.h.b16 %v385
        %v552 = vunpack.c.l.b16 %v386
        %v553 = vunpack.c.h.b16 %v386
        %v554 = vunpack.c.l.b16 %v387
        %v555 = vunpack.c.h.b16 %v387
        %v556 = vunpack.c.l.b16 %v388
        %v557 = vunpack.c.h.b16 %v388
        %v558 = vunpack.c.l.b16 %v389
        %v559 = vunpack.c.h.b16 %v389
        %v560 = vunpack.c.l.b16 %v390
        %v561 = vunpack.c.h.b16 %v390
        %v562 = vunpack.c.l.b16 %v391
        %v563 = vunpack.c.h.b16 %v391
        %v564 = vunpack.c.l.b16 %v392
        %v565 = vunpack.c.h.b16 %v392
        %v566 = vunpack.c.l.b16 %v393
        %v567 = vunpack.c.h.b16 %v393
        %v568 = vunpack.c.l.b16 %v394
        %v569 = vunpack.c.h.b16 %v394
        %v570 = vunpack.c.l.b16 %v395
        %v571 = vunpack.c.h.b16 %v395
        %v572 = vunpack.c.l.b16 %v396
        %v573 = vunpack.c.h.b16 %v396
        %v574 = vunpack.c.l.b16 %v397
        %v575 = vunpack.c.h.b16 %v397
        %v576 = vunpack.c.l.b16 %v398
        %v577 = vunpack.c.h.b16 %v398
        %v578 = vunpack.c.l.b16 %v399
        %v579 = vunpack.c.h.b16 %v399
        %v580 = vunpack.c.l.b16 %v400
        %v581 = vunpack.c.h.b16 %v400
        %v582 = vunpack.c.l.b16 %v401
        %v583 = vunpack.c.h.b16 %v401
        %v584 = vunpack.c.l.b16 %v402
        %v585 = vunpack.c.h.b16 %v402
        %v586 = vunpack.c.l.b16 %v403
        %v587 = vunpack.c.h.b16 %v403
        %v588 = vunpack.c.l.b16 %v404
        %v589 = vunpack.c.h.b16 %v404
        %v590 = vunpack.c.l.b16 %v405
        %v591 = vunpack.c.h.b16 %v405
        %v592 = vunpack.c.l.b16 %v406
        %v593 = vunpack.c.h.b16 %v406
        %v594 = vunpack.c.l.b16 %v407
        %v595 = vunpack.c.h.b16 %v407
        %v596 = vunpack.c.l.b16 %v408
        %v597 = vunpack.c.h.b16 %v408
        %v598 = vunpack.c.l.b16 %v409
        %v599 = vunpack.c.h.b16 %v409
        %v600 = vunpack.c.l.b16 %v410
        %v601 = vunpack.c.h.b16 %v410
        %v602 = vunpack.c.l.b16 %v411
        %v603 = vunpack.c.h.b16 %v411
        %v604 = vpack.c.b16 %v484, %v476
        %v605 = vpack.c.b16 %v485, %v477
        %v606 = vpack.c.b16 %v486, %v478
        %v607 = vpack.c.b16 %v487, %v479
        %v608 = vpack.c.b16 %v488, %v480
        %v609 = vpack.c.b16 %v489, %v481
        %v610 = vpack.c.b16 %v490, %v482
        %v611 = vpack.c.b16 %v491, %v483
        %v612 = vpack.c.b16 %v500, %v492
        %v613 = vpack.c.b16 %v501, %v493
        %v614 = vpack.c.b16 %v502, %v494
        %v615 = vpack.c.b16 %v503, %v495
        %v616 = vpack.c.b16 %v504, %v496
        %v617 = vpack.c.b16 %v505, %v497
        %v618 = vpack.c.b16 %v506, %v498
        %v619 = vpack.c.b16 %v507, %v499
        %v620 = vpack.c.b16 %v516, %v508
        %v621 = vpack.c.b16 %v517, %v509
        %v622 = vpack.c.b16 %v518, %v510
        %v623 = vpack.c.b16 %v519, %v511
        %v624 = vpack.c.b16 %v520, %v512
        %v625 = vpack.c.b16 %v521, %v513
        %v626 = vpack.c.b16 %v522, %v514
        %v627 = vpack.c.b16 %v523, %v515
        %v628 = vpack.c.b16 %v532, %v524
        %v629 = vpack.c.b16 %v533, %v525
        %v630 = vpack.c.b16 %v534, %v526
        %v631 = vpack.c.b16 %v535, %v527
        %v632 = vpack.c.b16 %v536, %v528
        %v633 = vpack.c.b16 %v537, %v529
        %v634 = vpack.c.b16 %v538, %v530
        %v635 = vpack.c.b16 %v539, %v531
        %v636 = vpack.c.b16 %v548, %v540
        %v637 = vpack.c.b16 %v549, %v541
        %v638 = vpack.c.b16 %v550, %v542
        %v639 = vpack.c.b16 %v551, %v543
        %v640 = vpack.c.b16 %v552, %v544
        %v641 = vpack.c.b16 %v553, %v545
        %v642 = vpack.c.b16 %v554, %v546
        %v643 = vpack.c.b16 %v555, %v547
        %v644 = vpack.c.b16 %v564, %v556
        %v645 = vpack.c.b16 %v565, %v557
        %v646 = vpack.c.b16 %v566, %v558
        %v647 = vpack.c.b16 %v567, %v559
        %v648 = vpack.c.b16 %v568, %v560
        %v649 = vpack.c.b16 %v569, %v561
        %v650 = vpack.c.b16 %v570, %v562
        %v651 = vpack.c.b16 %v571, %v563
        %v652 = vpack.c.b16 %v580, %v572
        %v653 = vpack.c.b16 %v581, %v573
        %v654 = vpack.c.b16 %v582, %v574
        %v655 = vpack.c.b16 %v583, %v575
        %v656 = vpack.c.b16 %v584, %v576
        %v657 = vpack.c.b16 %v585, %v577
        %v658 = vpack.c.b16 %v586, %v578
        %v659 = vpack.c.b16 %v587, %v579
        %v660 = vpack.c.b16 %v596, %v588
        %v661 = vpack.c.b16 %v597, %v589
        %v662 = vpack.c.b16 %v598, %v590
        %v663 = vpack.c.b16 %v599, %v591
        %v664 = vpack.c.b16 %v600, %v592
        %v665 = vpack.c.b16 %v601, %v593
        %v666 = vpack.c.b16 %v602, %v594
        %v667 = vpack.c.b16 %v603, %v595
        %732 = vmatpush.bf16.msra.mxu0 %v660
        %733 = vmatpush.bf16.msra.mxu0 %v652
        %734 = vmatpush.bf16.msra.mxu0 %v644
        %735 = vmatpush.bf16.msra.mxu0 %v636
        %736 = vmatpush.bf16.msra.mxu0 %v628
        %737 = vmatpush.bf16.msra.mxu0 %v620
        %738 = vmatpush.bf16.msra.mxu0 %v612
        %739 = vmatpush.bf16.msra.mxu0 %v604
        %740 = vmatmul.bf16.gmra.mxu0 %v347
        %v741 = vpop.f32.mrf.mxu0
        %v742 = vadd.f32 0.0, %v741
        %v743 = vpop.f32.mrf.mxu0
        %744 = vdwg.mxu0
        %745 = vmatpush.bf16.msra.mxu0 %v661
        %746 = vmatpush.bf16.msra.mxu0 %v653
        %747 = vmatpush.bf16.msra.mxu0 %v645
        %748 = vmatpush.bf16.msra.mxu0 %v637
        %749 = vmatpush.bf16.msra.mxu0 %v629
        %750 = vmatpush.bf16.msra.mxu0 %v621
        %751 = vmatpush.bf16.msra.mxu0 %v613
        %752 = vmatpush.bf16.msra.mxu0 %v605
        %753 = vmatmul.bf16.gmra.mxu0 %v347
        %v754 = vpop.f32.mrf.mxu0
        %v755 = vadd.f32 0.0, %v754
        %v756 = vpop.f32.mrf.mxu0
        %757 = vdwg.mxu0
        %758 = vmatpush.bf16.msra.mxu0 %v662
        %759 = vmatpush.bf16.msra.mxu0 %v654
        %760 = vmatpush.bf16.msra.mxu0 %v646
        %761 = vmatpush.bf16.msra.mxu0 %v638
        %762 = vmatpush.bf16.msra.mxu0 %v630
        %763 = vmatpush.bf16.msra.mxu0 %v622
        %764 = vmatpush.bf16.msra.mxu0 %v614
        %765 = vmatpush.bf16.msra.mxu0 %v606
        %766 = vmatmul.bf16.gmra.mxu0 %v347
        %v767 = vpop.f32.mrf.mxu0
        %v768 = vadd.f32 0.0, %v767
        %v769 = vpop.f32.mrf.mxu0
        %770 = vdwg.mxu0
        %771 = vmatpush.bf16.msra.mxu0 %v663
        %772 = vmatpush.bf16.msra.mxu0 %v655
        %773 = vmatpush.bf16.msra.mxu0 %v647
        %774 = vmatpush.bf16.msra.mxu0 %v639
        %775 = vmatpush.bf16.msra.mxu0 %v631
        %776 = vmatpush.bf16.msra.mxu0 %v623
        %777 = vmatpush.bf16.msra.mxu0 %v615
        %778 = vmatpush.bf16.msra.mxu0 %v607
        %779 = vmatmul.bf16.gmra.mxu0 %v347
        %v780 = vpop.f32.mrf.mxu0
        %v781 = vadd.f32 0.0, %v780
        %v782 = vpop.f32.mrf.mxu0
        %783 = vdwg.mxu0
        %784 = vmatpush.bf16.msra.mxu0 %v664
        %785 = vmatpush.bf16.msra.mxu0 %v656
        %786 = vmatpush.bf16.msra.mxu0 %v648
        %787 = vmatpush.bf16.msra.mxu0 %v640
        %788 = vmatpush.bf16.msra.mxu0 %v632
        %789 = vmatpush.bf16.msra.mxu0 %v624
        %790 = vmatpush.bf16.msra.mxu0 %v616
        %791 = vmatpush.bf16.msra.mxu0 %v608
        %792 = vmatmul.bf16.gmra.mxu0 %v347
        %v793 = vpop.f32.mrf.mxu0
        %v794 = vadd.f32 0.0, %v793
        %v795 = vpop.f32.mrf.mxu0
        %796 = vdwg.mxu0
        %797 = vmatpush.bf16.msra.mxu0 %v665
        %798 = vmatpush.bf16.msra.mxu0 %v657
        %799 = vmatpush.bf16.msra.mxu0 %v649
        %800 = vmatpush.bf16.msra.mxu0 %v641
        %801 = vmatpush.bf16.msra.mxu0 %v633
        %802 = vmatpush.bf16.msra.mxu0 %v625
        %803 = vmatpush.bf16.msra.mxu0 %v617
        %804 = vmatpush.bf16.msra.mxu0 %v609
        %805 = vmatmul.bf16.gmra.mxu0 %v347
        %v806 = vpop.f32.mrf.mxu0
        %v807 = vadd.f32 0.0, %v806
        %v808 = vpop.f32.mrf.mxu0
        %809 = vdwg.mxu0
        %810 = vmatpush.bf16.msra.mxu0 %v666
        %811 = vmatpush.bf16.msra.mxu0 %v658
        %812 = vmatpush.bf16.msra.mxu0 %v650
        %813 = vmatpush.bf16.msra.mxu0 %v642
        %814 = vmatpush.bf16.msra.mxu0 %v634
        %815 = vmatpush.bf16.msra.mxu0 %v626
        %816 = vmatpush.bf16.msra.mxu0 %v618
        %817 = vmatpush.bf16.msra.mxu0 %v610
        %818 = vmatmul.bf16.gmra.mxu0 %v347
        %v819 = vpop.f32.mrf.mxu0
        %v820 = vadd.f32 0.0, %v819
        %v821 = vpop.f32.mrf.mxu0
        %822 = vdwg.mxu0
        %823 = vmatpush.bf16.msra.mxu0 %v667
        %824 = vmatpush.bf16.msra.mxu0 %v659
        %825 = vmatpush.bf16.msra.mxu0 %v651
        %826 = vmatpush.bf16.msra.mxu0 %v643
        %827 = vmatpush.bf16.msra.mxu0 %v635
        %828 = vmatpush.bf16.msra.mxu0 %v627
        %829 = vmatpush.bf16.msra.mxu0 %v619
        %830 = vmatpush.bf16.msra.mxu0 %v611
        %831 = vmatmul.bf16.gmra.mxu0 %v347
        %v832 = vpop.f32.mrf.mxu0
        %v833 = vadd.f32 0.0, %v832
        %v834 = vpop.f32.mrf.mxu0
        %835 = vdwg.mxu0
        %v836 = vadd.f32 %v339, %v742
        %v837 = vadd.f32 %v340, %v755
        %v838 = vadd.f32 %v341, %v768
        %v839 = vadd.f32 %v342, %v781
        %v840 = vadd.f32 %v343, %v794
        %v841 = vadd.f32 %v344, %v807
        %v842 = vadd.f32 %v345, %v820
        %v843 = vadd.f32 %v346, %v833
        %844 = vst [vmem:[#allocation2] sm:$0xff] %v836
        %845 = vst [vmem:[#allocation2 + $0x8] sm:$0xff] %v837
        %846 = vst [vmem:[#allocation2 + $0x10] sm:$0xff] %v838
        %847 = vst [vmem:[#allocation2 + $0x18] sm:$0xff] %v839
        %848 = vst [vmem:[#allocation2 + $0x20] sm:$0xff] %v840
        %849 = vst [vmem:[#allocation2 + $0x28] sm:$0xff] %v841
        %850 = vst [vmem:[#allocation2 + $0x30] sm:$0xff] %v842
        %851 = vst [vmem:[#allocation2 + $0x38] sm:$0xff] %v843
        // Predicated region
        $region56: #{deconv_forward.3} parent=46 // pred_check
          %p852 = pneg %p327
        $region57: #{deconv_forward.3} parent=46 // pred_check_branch
          %854 = sbr.rel (%p852) target = $region59
        $region58: #{deconv_forward.3} parent=46 // pred_region
          %v855 = vld [vmem:[#allocation2] sm:$0xff]
          %v856 = vld [vmem:[#allocation2 + $0x8] sm:$0xff]
          %v857 = vld [vmem:[#allocation2 + $0x10] sm:$0xff]
          %v858 = vld [vmem:[#allocation2 + $0x18] sm:$0xff]
          %v859 = vld [vmem:[#allocation2 + $0x20] sm:$0xff]
          %v860 = vld [vmem:[#allocation2 + $0x28] sm:$0xff]
          %v861 = vld [vmem:[#allocation2 + $0x30] sm:$0xff]
          %v862 = vld [vmem:[#allocation2 + $0x38] sm:$0xff]
          %863 = vst [vmem:[%s325] sm:$0xff] %v855
          %864 = vst [vmem:[%s325 + $0x8] sm:$0xff] %v856
          %865 = vst [vmem:[%s325 + $0x10] sm:$0xff] %v857
          %866 = vst [vmem:[%s325 + $0x18] sm:$0xff] %v858
          %867 = vst [vmem:[%s325 + $0x20] sm:$0xff] %v859
          %868 = vst [vmem:[%s325 + $0x28] sm:$0xff] %v860
          %869 = vst [vmem:[%s325 + $0x30] sm:$0xff] %v861
          %870 = vst [vmem:[%s325 + $0x38] sm:$0xff] %v862
        $region59: #{deconv_forward.3} parent=46 // pred_fallthru
          _
        %s871 = smul.u32 8, %s17
        %p872 = scmp.lt.s32.totalorder %s871, 15
        %s873 = scalar_select %p872, %s871, 15
        %s874 = smul.addr %s873, 8
        %s875 = scalar_lea.vmem %s2, %s874
        // Predicated region
        $region60: #{deconv_forward.3} parent=46 // pred_check
          %p876 = pneg %p97
        $region61: #{deconv_forward.3} parent=46 // pred_check_branch
          %878 = sbr.rel (%p876) target = $region63
        $region62: #{deconv_forward.3} parent=46 // pred_region
          %s879 = smul.u32 8, %s17
        $region63: #{deconv_forward.3} parent=46 // pred_fallthru
          _
      $region47: #{deconv_forward.3} parent=5 // pred_fallthru
        _
      %p880 = scmp.le.s32.totalorder 2, %s8
      // Predicated region
      $region64: #{deconv_forward.3} parent=5 // pred_check
        %p881 = pneg %p880
      $region65: #{deconv_forward.3} parent=5 // pred_check_branch
        %883 = sbr.rel (%p881) target = $region67
      $region66: #{deconv_forward.3} parent=5 // pred_region
        %s884 = ssub.s32 %s8, 2
        // Predicated region
        $region68: #{deconv_forward.3} parent=66 // pred_check
          %p885 = pneg %p103
        $region69: #{deconv_forward.3} parent=66 // pred_check_branch
          %887 = sbr.rel (%p885) target = $region71
        $region70: #{deconv_forward.3} parent=66 // pred_region
          %s888 = smul.u32 8, %s19
          %p889 = scmp.lt.s32.totalorder %s888, 15
          %s890 = scalar_select %p889, %s888, 15
          %s891 = smul.addr %s890, 8
          %s892 = scalar_lea.vmem %s2, %s891
        $region71: #{deconv_forward.3} parent=66 // pred_fallthru
          _
      $region67: #{deconv_forward.3} parent=5 // pred_fallthru
        _
    $region6: #{deconv_forward.3} parent=1 // loop_footer
      %s12 = sadd.s32 1, %s8
    $region7: #{deconv_forward.3} parent=1 // loop_footer_branch
      %7 = sbr.rel target = $region3
    $region8: #{deconv_forward.3} parent=1 // loop_exit
      _

</llo_original>
